<compile_context>
chip_gen: v5e
topology: v5e:2x2
jax: 0.10.0
libtpu: 0.0.40
codegen_flags: <defaults>
</compile_context>

<pallas_src>
import functools

import jax
import jax.numpy as jnp
from jax.experimental import pallas as pl
from jax.experimental.pallas import tpu as pltpu

KSIZE = 3       # kernel size of both convs in DBlock_com1
PAD = 3         # total row halo: dilation-2 conv (2 rows) + dilation-1 conv (1 row)
GUARD = 128     # lane guard band around the flattened row windows


def _fused_dblock_kernel(xc_ref, xh_ref, w1_ref, w2_ref, b1_ref, b2_ref, m_ref,
                         o_ref, xwin_ref, ywin_ref, *, T, W):
    """Fused [3x3 conv d=2 + ReLU] -> [3x3 conv d=1 + ReLU] on one row tile.

    xc_ref : (1, Cin, T*W)        current tile of x (rows flattened onto lanes)
    xh_ref : (1, Cin, 6*W)        halo rows: 3 above + 3 below (zeros off-image)
    w1_ref : (9, Cout, Cin)       conv1 weights, tap index = kh*3 + kw
    w2_ref : (9, Cout, Cout)      conv2 weights, tap index = kh*3 + kw
    b1_ref, b2_ref : (Cout, 1)    biases (f32)
    m_ref  : (4, (T+2)*W)         0/1 column-validity masks for dw = -2,+2,-1,+1
    o_ref  : (1, Cout, T*W)       output tile
    xwin_ref : (Cin,  2G+(T+6)*W) VMEM scratch: x window + guard bands
    ywin_ref : (Cout, 2G+(T+2)*W) VMEM scratch: y window + guard bands
    """
    f32 = jnp.float32
    cdt = xwin_ref.dtype                      # MXU operand dtype (f32 or bf16)
    cout = o_ref.shape[1]
    cin = xc_ref.shape[1]
    NX = (T + 2) * W                          # y rows incl. the +-1 row halo
    NZ = T * W                                # output rows of this tile
    WXW = 2 * GUARD + (T + 6) * W
    WYW = 2 * GUARD + (T + 2) * W
    h = pl.program_id(1)

    # ---- assemble the (Cin, (T+6)*W) x window (zeroed guard bands) --------
    xwin_ref[:, 0:GUARD] = jnp.zeros((cin, GUARD), cdt)
    xwin_ref[:, GUARD:GUARD + 3 * W] = xh_ref[0, :, 0:3 * W].astype(cdt)
    xwin_ref[:, GUARD + 3 * W:GUARD + (T + 3) * W] = xc_ref[0].astype(cdt)
    xwin_ref[:, GUARD + (T + 3) * W:GUARD + (T + 6) * W] = (
        xh_ref[0, :, 3 * W:6 * W].astype(cdt))
    xwin_ref[:, GUARD + (T + 6) * W:WXW] = jnp.zeros((cin, GUARD), cdt)

    b1 = b1_ref[...]
    b2 = b2_ref[...]
    # column-validity masks (1, n): a tap with column offset dw must not read
    # across an image-row boundary; wrapped / guard columns are zeroed here.
    m_m2 = m_ref[0:1, :]
    m_p2 = m_ref[1:2, :]
    m_m1 = m_ref[2:3, 0:NZ]
    m_p1 = m_ref[3:4, 0:NZ]

    def tap(w_ref, src_ref, kidx, row0, dw, n, mask):
        # One conv tap over ALL rows of the tile: a single
        # (Cout, C) x (C, n) MXU matmul on a statically shifted window slice.
        start = GUARD + row0 * W + dw
        rhs = src_ref[:, start:start + n]
        out = jnp.dot(w_ref[kidx], rhs, preferred_element_type=f32)
        if mask is not None:
            out = out * mask
        return out

    # ---- conv1 (3x3, dilation=2) batched over all T+2 y rows --------------
    acc1 = jnp.zeros((cout, NX), f32)
    for kh in range(KSIZE):
        for kw in range(KSIZE):
            dw = 2 * (kw - 1)
            mask = None if dw == 0 else (m_m2 if dw < 0 else m_p2)
            acc1 = acc1 + tap(w1_ref, xwin_ref, kh * 3 + kw, 2 * kh, dw, NX, mask)
    y = jnp.maximum(acc1 + b1, 0.0)

    ywin_ref[:, 0:GUARD] = jnp.zeros((cout, GUARD), cdt)
    ywin_ref[:, GUARD:GUARD + NX] = y.astype(cdt)
    ywin_ref[:, GUARD + NX:WYW] = jnp.zeros((cout, GUARD), cdt)

    # conv2 zero-pads y at the image top/bottom: the first / last y-window row
    # lies outside the image for the first / last row tile.
    @pl.when(h == 0)
    def _():
        ywin_ref[:, GUARD:GUARD + W] = jnp.zeros((cout, W), cdt)

    @pl.when(h == pl.num_programs(1) - 1)
    def _():
        ywin_ref[:, GUARD + (T + 1) * W:GUARD + NX] = jnp.zeros((cout, W), cdt)

    # ---- conv2 (3x3, dilation=1) batched over all T output rows -----------
    acc2 = jnp.zeros((cout, NZ), f32)
    for kh in range(KSIZE):
        for kw in range(KSIZE):
            dw = kw - 1
            mask = None if dw == 0 else (m_m1 if dw < 0 else m_p1)
            acc2 = acc2 + tap(w2_ref, ywin_ref, kh * 3 + kw, kh, dw, NZ, mask)
    z = jnp.maximum(acc2 + b2, 0.0)
    o_ref[0] = z.astype(o_ref.dtype)          # one dense (Cout, T*W) slab store


def _vmem_estimate(Cin, Cout, T, W, op_bytes):
    """Rough per-grid-step VMEM footprint (double-buffered blocks + scratch)."""
    f32b = 4
    blocks = 2 * f32b * (Cin * T * W + Cin * 6 * W + Cout * T * W)
    weights = (9 * Cout * (Cin + Cout) * op_bytes + 2 * Cout * f32b
               + 4 * (T + 2) * W * f32b)
    scratch = op_bytes * (Cin * ((T + 6) * W + 2 * GUARD)
                          + Cout * ((T + 2) * W + 2 * GUARD))
    transient = f32b * (T + 2) * W * (2 * Cout + max(Cin, Cout))
    return blocks + weights + scratch + transient


def _choose_row_tile(H, W, Cin, Cout, target, op_bytes, budget):
    """Pick T dividing H with (T*W) % 128 == 0 (or T == H), near `target`,
    shrinking while the VMEM estimate exceeds `budget`."""
    feasible = sorted(d for d in range(1, H + 1)
                      if H % d == 0 and ((d * W) % 128 == 0 or d == H))
    cands = [d for d in feasible if d <= target] or feasible[:1]
    i = len(cands) - 1
    while i > 0 and _vmem_estimate(Cin, Cout, cands[i], W, op_bytes) > budget:
        i -= 1
    return cands[i]


def dblock_com1_forward(x_nchw, params, *, row_tile=32,
                        operand_dtype=jnp.float32):
    """DBlock_com1 forward.  x_nchw: (N, C, H, W), same layout as PyTorch.

    operand_dtype: dtype of the MXU operands (weights + window scratches).
    jnp.bfloat16 enables the fast MXU path on v5e/v6e/v7x; accumulation and
    all elementwise math stay float32.
    """
    N, Cin, H, W = x_nchw.shape
    w1, b1, w2, b2 = params["w1"], params["b1"], params["w2"], params["b2"]
    Cout = w1.shape[0]
    assert w2.shape[1] == Cout, "DBlock_com1 requires in_channels == out_channels"

    op_bytes = jnp.dtype(operand_dtype).itemsize
    try:   # per-generation sizing: 128 MiB on v5e/v6e, 64 MiB per TC on v7x
        vmem_cap = int(pltpu.get_tpu_info().vmem_capacity_bytes)
    except Exception:
        vmem_cap = 64 * 1024 * 1024            # conservative default
    budget = int(vmem_cap * 0.7)

    T = _choose_row_tile(H, W, Cin, Cout, row_tile, op_bytes, budget)
    num_t = H // T                              # grid = (N, num_t); keep it >1
    NX = (T + 2) * W                            # so v7x's two TCs both get work

    # -- weights as per-tap (Cout, C) matrices, tap index = kh*3 + kw --------
    w1t = jnp.transpose(w1, (2, 3, 0, 1)).reshape(9, Cout, Cin).astype(operand_dtype)
    w2t = jnp.transpose(w2, (2, 3, 0, 1)).reshape(9, Cout, Cout).astype(operand_dtype)
    b1c = b1.reshape(Cout, 1).astype(jnp.float32)
    b2c = b2.reshape(Cout, 1).astype(jnp.float32)

    # -- flatten image rows onto the lane axis (free reshape) ----------------
    x2 = x_nchw.reshape(N, Cin, H * W)

    # -- per-tile halo side array: 3 rows above + 3 rows below each tile -----
    xp = jnp.pad(x_nchw, ((0, 0), (0, 0), (PAD, PAD), (0, 0)))
    halos = []
    for h in range(num_t):
        r0 = h * T
        halos.append(jnp.concatenate(
            [xp[:, :, r0:r0 + PAD, :],
             xp[:, :, r0 + T + PAD:r0 + T + 2 * PAD, :]], axis=2))
    halo = jnp.stack(halos, axis=1).reshape(N * num_t, Cin, 2 * PAD * W)

    # -- column-validity masks for the +-1 / +-2 column taps -----------------
    wcol = jnp.arange(NX, dtype=jnp.int32) % W
    masks = jnp.stack([wcol >= 2, wcol < W - 2,
                       wcol >= 1, wcol < W - 1]).astype(jnp.float32)

    est = _vmem_estimate(Cin, Cout, T, W, op_bytes)
    vmem_limit = int(max(32 * 1024 * 1024,
                         min(int(vmem_cap * 0.85),
                             2 * est + 8 * 1024 * 1024)))

    kernel = functools.partial(_fused_dblock_kernel, T=T, W=W)
    out2 = pl.pallas_call(
        kernel,
        out_shape=jax.ShapeDtypeStruct((N, Cout, H * W), x_nchw.dtype),
        grid_spec=pltpu.PrefetchScalarGridSpec(
            num_scalar_prefetch=0,
            grid=(N, num_t),
            in_specs=[
                pl.BlockSpec((1, Cin, T * W), lambda n, h: (n, 0, h)),
                pl.BlockSpec((1, Cin, 2 * PAD * W),
                             lambda n, h: (n * num_t + h, 0, 0)),
                pl.BlockSpec((9, Cout, Cin), lambda n, h: (0, 0, 0)),
                pl.BlockSpec((9, Cout, Cout), lambda n, h: (0, 0, 0)),
                pl.BlockSpec((Cout, 1), lambda n, h: (0, 0)),
                pl.BlockSpec((Cout, 1), lambda n, h: (0, 0)),
                pl.BlockSpec((4, NX), lambda n, h: (0, 0)),
            ],
            out_specs=pl.BlockSpec((1, Cout, T * W), lambda n, h: (n, 0, h)),
            scratch_shapes=[
                pltpu.VMEM((Cin, 2 * GUARD + (T + 6) * W), operand_dtype),
                pltpu.VMEM((Cout, 2 * GUARD + (T + 2) * W), operand_dtype),
            ],
        ),
        compiler_params=pltpu.CompilerParams(
            dimension_semantics=("parallel", "parallel"),
            vmem_limit_bytes=vmem_limit,
        ),
    )(x2, halo, w1t, w2t, b1c, b2c, masks)
    return out2.reshape(N, Cout, H, W)


def _reference_forward(x_nchw, params):
    """Pure-JAX reference (lax.conv_general_dilated) used for validation."""
    def conv_relu(x, w, b, d):
        p = (KSIZE // 2) + d - 1     # MWCNN default_conv padding rule -> 'same'
        y = jax.lax.conv_general_dilated(
            x, w, window_strides=(1, 1), padding=[(p, p), (p, p)],
            rhs_dilation=(d, d), dimension_numbers=("NCHW", "OIHW", "NCHW"))
        return jnp.maximum(y + b.reshape(1, -1, 1, 1), 0.0)

    y = conv_relu(x_nchw, params["w1"], params["b1"], 2)
    return conv_relu(y, params["w2"], params["b2"], 1)


def init_params(key, in_ch, out_ch):
    """Deterministic synthetic params in PyTorch OIHW layout."""
    k1, k2, k3, k4 = jax.random.split(key, 4)
    std = 1.0 / float((in_ch * KSIZE * KSIZE) ** 0.5)
    return {
        "w1": jax.random.normal(k1, (out_ch, in_ch, KSIZE, KSIZE), jnp.float32) * std,
        "b1": jax.random.normal(k2, (out_ch,), jnp.float32) * std,
        "w2": jax.random.normal(k3, (out_ch, out_ch, KSIZE, KSIZE), jnp.float32) * std,
        "b2": jax.random.normal(k4, (out_ch,), jnp.float32) * std,
    }


if __name__ == "__main__":
    key = jax.random.PRNGKey(0)
    kx, kp = jax.random.split(key)

    N, C, H, W = 2, 4, 16, 16      # in_channels == out_channels == 4
    x = jax.random.normal(kx, (N, C, H, W), jnp.float32)
    params = init_params(kp, C, C)

    ref = jax.block_until_ready(_reference_forward(x, params))

    # f32 MXU-operand path.  row_tile=8 -> a 2x2 (batch x row-tile) grid,
    # exercising both interior and image-boundary halo paths.
    fwd = jax.jit(functools.partial(dblock_com1_forward, row_tile=8))
    out = jax.block_until_ready(fwd(x, params))
    assert out.shape == (N, C, H, W)
    assert jnp.allclose(out, ref, atol=2e-4, rtol=2e-4), "f32 path mismatch"

    # bf16 MXU-operand path (f32 accumulation), looser tolerance.
    fwd_bf16 = jax.jit(functools.partial(
        dblock_com1_forward, row_tile=8, operand_dtype=jnp.bfloat16))
    out_bf16 = jax.block_until_ready(fwd_bf16(x, params))
    assert jnp.allclose(out_bf16, ref, atol=7e-2, rtol=7e-2), "bf16 path mismatch"

    print("KERNEL_OK")
</pallas_src>

<mosaic_0001>
module attributes {stable_mosaic.version = 11 : i64} {
  func.func @_fused_dblock_kernel(%arg0: i32, %arg1: i32, %arg2: memref<1x4x128xf32, #tpu.memory_space<vmem>>, %arg3: memref<1x4x96xf32, #tpu.memory_space<vmem>>, %arg4: memref<9x4x4xf32, #tpu.memory_space<vmem>>, %arg5: memref<9x4x4xf32, #tpu.memory_space<vmem>>, %arg6: memref<4x1xf32, #tpu.memory_space<vmem>>, %arg7: memref<4x1xf32, #tpu.memory_space<vmem>>, %arg8: memref<4x160xf32, #tpu.memory_space<vmem>>, %arg9: memref<1x4x128xf32, #tpu.memory_space<vmem>>, %arg10: memref<4x480xf32, #tpu.memory_space<vmem>>, %arg11: memref<4x416xf32, #tpu.memory_space<vmem>>) attributes {dimension_semantics = [#tpu.dimension_semantics<parallel>, #tpu.dimension_semantics<parallel>], iteration_bounds = array<i64: 2, 2>, scalar_prefetch = 0 : i64, scratch_operands = 2 : i64, tpu.core_type = #tpu.core_type<tc>, window_params = [{transform_indices = @transform_0, window_bounds = array<i64: 1, 4, 128>}, {transform_indices = @transform_1, window_bounds = array<i64: 1, 4, 96>}, {pipeline_mode = #tpu.pipeline_mode<synchronous>, transform_indices = @transform_2, window_bounds = array<i64: 9, 4, 4>}, {pipeline_mode = #tpu.pipeline_mode<synchronous>, transform_indices = @transform_3, window_bounds = array<i64: 9, 4, 4>}, {pipeline_mode = #tpu.pipeline_mode<synchronous>, transform_indices = @transform_4, window_bounds = array<i64: 4, 1>}, {pipeline_mode = #tpu.pipeline_mode<synchronous>, transform_indices = @transform_5, window_bounds = array<i64: 4, 1>}, {pipeline_mode = #tpu.pipeline_mode<synchronous>, transform_indices = @transform_6, window_bounds = array<i64: 4, 160>}, {transform_indices = @transform_7, window_bounds = array<i64: 1, 4, 128>}]} {
    %cst = arith.constant 0.000000e+00 : f32
    %0 = vector.broadcast %cst : f32 to vector<4x128xf32>
    %c0 = arith.constant 0 : index
    %c0_0 = arith.constant 0 : index
    %1 = vector.load %arg10[%c0, %c0_0] : memref<4x480xf32, #tpu.memory_space<vmem>>, vector<4x128xf32>
    tpu.vector_store %arg10[%c0, %c0_0], %0 {strides = array<i32>} : memref<4x480xf32, #tpu.memory_space<vmem>>, vector<4x128xf32>,
    %c0_1 = arith.constant 0 : index
    %c0_2 = arith.constant 0 : index
    %c0_3 = arith.constant 0 : index
    %2 = vector.load %arg3[%c0_1, %c0_2, %c0_3] : memref<1x4x96xf32, #tpu.memory_space<vmem>>, vector<1x4x48xf32>
    %3 = vector.shape_cast %2 : vector<1x4x48xf32> to vector<4x48xf32>
    %c0_4 = arith.constant 0 : index
    %c128 = arith.constant 128 : index
    %4 = vector.load %arg10[%c0_4, %c128] : memref<4x480xf32, #tpu.memory_space<vmem>>, vector<4x48xf32>
    tpu.vector_store %arg10[%c0_4, %c128], %3 {strides = array<i32>} : memref<4x480xf32, #tpu.memory_space<vmem>>, vector<4x48xf32>,
    %c0_5 = arith.constant 0 : index
    %c0_6 = arith.constant 0 : index
    %c0_7 = arith.constant 0 : index
    %5 = vector.load %arg2[%c0_5, %c0_6, %c0_7] : memref<1x4x128xf32, #tpu.memory_space<vmem>>, vector<1x4x128xf32>
    %6 = vector.shape_cast %5 : vector<1x4x128xf32> to vector<4x128xf32>
    %c0_8 = arith.constant 0 : index
    %c176 = arith.constant 176 : index
    %7 = vector.load %arg10[%c0_8, %c176] : memref<4x480xf32, #tpu.memory_space<vmem>>, vector<4x128xf32>
    tpu.vector_store %arg10[%c0_8, %c176], %6 {strides = array<i32>} : memref<4x480xf32, #tpu.memory_space<vmem>>, vector<4x128xf32>,
    %c0_9 = arith.constant 0 : index
    %c0_10 = arith.constant 0 : index
    %c48 = arith.constant 48 : index
    %8 = vector.load %arg3[%c0_9, %c0_10, %c48] : memref<1x4x96xf32, #tpu.memory_space<vmem>>, vector<1x4x48xf32>
    %9 = vector.shape_cast %8 : vector<1x4x48xf32> to vector<4x48xf32>
    %c0_11 = arith.constant 0 : index
    %c304 = arith.constant 304 : index
    %10 = vector.load %arg10[%c0_11, %c304] : memref<4x480xf32, #tpu.memory_space<vmem>>, vector<4x48xf32>
    tpu.vector_store %arg10[%c0_11, %c304], %9 {strides = array<i32>} : memref<4x480xf32, #tpu.memory_space<vmem>>, vector<4x48xf32>,
    %cst_12 = arith.constant 0.000000e+00 : f32
    %11 = vector.broadcast %cst_12 : f32 to vector<4x128xf32>
    %c0_13 = arith.constant 0 : index
    %c352 = arith.constant 352 : index
    %12 = vector.load %arg10[%c0_13, %c352] : memref<4x480xf32, #tpu.memory_space<vmem>>, vector<4x128xf32>
    tpu.vector_store %arg10[%c0_13, %c352], %11 {strides = array<i32>} : memref<4x480xf32, #tpu.memory_space<vmem>>, vector<4x128xf32>,
    %c0_14 = arith.constant 0 : index
    %c0_15 = arith.constant 0 : index
    %13 = vector.load %arg6[%c0_14, %c0_15] : memref<4x1xf32, #tpu.memory_space<vmem>>, vector<4x1xf32>
    %c0_16 = arith.constant 0 : index
    %c0_17 = arith.constant 0 : index
    %14 = vector.load %arg7[%c0_16, %c0_17] : memref<4x1xf32, #tpu.memory_space<vmem>>, vector<4x1xf32>
    %c0_18 = arith.constant 0 : index
    %c0_19 = arith.constant 0 : index
    %15 = vector.load %arg8[%c0_18, %c0_19] : memref<4x160xf32, #tpu.memory_space<vmem>>, vector<1x160xf32>
    %c1 = arith.constant 1 : index
    %c0_20 = arith.constant 0 : index
    %16 = vector.load %arg8[%c1, %c0_20] : memref<4x160xf32, #tpu.memory_space<vmem>>, vector<1x160xf32>
    %c2 = arith.constant 2 : index
    %c0_21 = arith.constant 0 : index
    %17 = vector.load %arg8[%c2, %c0_21] : memref<4x160xf32, #tpu.memory_space<vmem>>, vector<1x128xf32>
    %c3 = arith.constant 3 : index
    %c0_22 = arith.constant 0 : index
    %18 = vector.load %arg8[%c3, %c0_22] : memref<4x160xf32, #tpu.memory_space<vmem>>, vector<1x128xf32>
    %cst_23 = arith.constant 0.000000e+00 : f32
    %19 = vector.broadcast %cst_23 : f32 to vector<4x160xf32>
    %c0_24 = arith.constant 0 : index
    %c126 = arith.constant 126 : index
    %20 = vector.load %arg10[%c0_24, %c126] : memref<4x480xf32, #tpu.memory_space<vmem>>, vector<4x160xf32>
    %c0_25 = arith.constant 0 : index
    %c0_26 = arith.constant 0 : index
    %c0_27 = arith.constant 0 : index
    %21 = vector.load %arg4[%c0_25, %c0_26, %c0_27] : memref<9x4x4xf32, #tpu.memory_space<vmem>>, vector<1x4x4xf32>
    %22 = vector.shape_cast %21 : vector<1x4x4xf32> to vector<4x4xf32>
    %cst_28 = arith.constant dense<0.000000e+00> : vector<4x160xf32>
    %23 = tpu.matmul %22, %20, %cst_28 {dimension_numbers = #tpu.dot_dimension_numbers<[1], [0], [0], [1], [0, 0, 1, 1], [], []>} : vector<4x4xf32>, vector<4x160xf32>, vector<4x160xf32> -> vector<4x160xf32>
    %24 = vector.broadcast %15 : vector<1x160xf32> to vector<4x160xf32>
    %25 = arith.mulf %23, %24 : vector<4x160xf32>
    %26 = arith.addf %19, %25 : vector<4x160xf32>
    %c0_29 = arith.constant 0 : index
    %c128_30 = arith.constant 128 : index
    %27 = vector.load %arg10[%c0_29, %c128_30] : memref<4x480xf32, #tpu.memory_space<vmem>>, vector<4x160xf32>
    %c1_31 = arith.constant 1 : index
    %c0_32 = arith.constant 0 : index
    %c0_33 = arith.constant 0 : index
    %28 = vector.load %arg4[%c1_31, %c0_32, %c0_33] : memref<9x4x4xf32, #tpu.memory_space<vmem>>, vector<1x4x4xf32>
    %29 = vector.shape_cast %28 : vector<1x4x4xf32> to vector<4x4xf32>
    %cst_34 = arith.constant dense<0.000000e+00> : vector<4x160xf32>
    %30 = tpu.matmul %29, %27, %cst_34 {dimension_numbers = #tpu.dot_dimension_numbers<[1], [0], [0], [1], [0, 0, 1, 1], [], []>} : vector<4x4xf32>, vector<4x160xf32>, vector<4x160xf32> -> vector<4x160xf32>
    %31 = arith.addf %26, %30 : vector<4x160xf32>
    %c0_35 = arith.constant 0 : index
    %c130 = arith.constant 130 : index
    %32 = vector.load %arg10[%c0_35, %c130] : memref<4x480xf32, #tpu.memory_space<vmem>>, vector<4x160xf32>
    %c2_36 = arith.constant 2 : index
    %c0_37 = arith.constant 0 : index
    %c0_38 = arith.constant 0 : index
    %33 = vector.load %arg4[%c2_36, %c0_37, %c0_38] : memref<9x4x4xf32, #tpu.memory_space<vmem>>, vector<1x4x4xf32>
    %34 = vector.shape_cast %33 : vector<1x4x4xf32> to vector<4x4xf32>
    %cst_39 = arith.constant dense<0.000000e+00> : vector<4x160xf32>
    %35 = tpu.matmul %34, %32, %cst_39 {dimension_numbers = #tpu.dot_dimension_numbers<[1], [0], [0], [1], [0, 0, 1, 1], [], []>} : vector<4x4xf32>, vector<4x160xf32>, vector<4x160xf32> -> vector<4x160xf32>
    %36 = vector.broadcast %16 : vector<1x160xf32> to vector<4x160xf32>
    %37 = arith.mulf %35, %36 : vector<4x160xf32>
    %38 = arith.addf %31, %37 : vector<4x160xf32>
    %c0_40 = arith.constant 0 : index
    %c158 = arith.constant 158 : index
    %39 = vector.load %arg10[%c0_40, %c158] : memref<4x480xf32, #tpu.memory_space<vmem>>, vector<4x160xf32>
    %c3_41 = arith.constant 3 : index
    %c0_42 = arith.constant 0 : index
    %c0_43 = arith.constant 0 : index
    %40 = vector.load %arg4[%c3_41, %c0_42, %c0_43] : memref<9x4x4xf32, #tpu.memory_space<vmem>>, vector<1x4x4xf32>
    %41 = vector.shape_cast %40 : vector<1x4x4xf32> to vector<4x4xf32>
    %cst_44 = arith.constant dense<0.000000e+00> : vector<4x160xf32>
    %42 = tpu.matmul %41, %39, %cst_44 {dimension_numbers = #tpu.dot_dimension_numbers<[1], [0], [0], [1], [0, 0, 1, 1], [], []>} : vector<4x4xf32>, vector<4x160xf32>, vector<4x160xf32> -> vector<4x160xf32>
    %43 = vector.broadcast %15 : vector<1x160xf32> to vector<4x160xf32>
    %44 = arith.mulf %42, %43 : vector<4x160xf32>
    %45 = arith.addf %38, %44 : vector<4x160xf32>
    %c0_45 = arith.constant 0 : index
    %c160 = arith.constant 160 : index
    %46 = vector.load %arg10[%c0_45, %c160] : memref<4x480xf32, #tpu.memory_space<vmem>>, vector<4x160xf32>
    %c4 = arith.constant 4 : index
    %c0_46 = arith.constant 0 : index
    %c0_47 = arith.constant 0 : index
    %47 = vector.load %arg4[%c4, %c0_46, %c0_47] : memref<9x4x4xf32, #tpu.memory_space<vmem>>, vector<1x4x4xf32>
    %48 = vector.shape_cast %47 : vector<1x4x4xf32> to vector<4x4xf32>
    %cst_48 = arith.constant dense<0.000000e+00> : vector<4x160xf32>
    %49 = tpu.matmul %48, %46, %cst_48 {dimension_numbers = #tpu.dot_dimension_numbers<[1], [0], [0], [1], [0, 0, 1, 1], [], []>} : vector<4x4xf32>, vector<4x160xf32>, vector<4x160xf32> -> vector<4x160xf32>
    %50 = arith.addf %45, %49 : vector<4x160xf32>
    %c0_49 = arith.constant 0 : index
    %c162 = arith.constant 162 : index
    %51 = vector.load %arg10[%c0_49, %c162] : memref<4x480xf32, #tpu.memory_space<vmem>>, vector<4x160xf32>
    %c5 = arith.constant 5 : index
    %c0_50 = arith.constant 0 : index
    %c0_51 = arith.constant 0 : index
    %52 = vector.load %arg4[%c5, %c0_50, %c0_51] : memref<9x4x4xf32, #tpu.memory_space<vmem>>, vector<1x4x4xf32>
    %53 = vector.shape_cast %52 : vector<1x4x4xf32> to vector<4x4xf32>
    %cst_52 = arith.constant dense<0.000000e+00> : vector<4x160xf32>
    %54 = tpu.matmul %53, %51, %cst_52 {dimension_numbers = #tpu.dot_dimension_numbers<[1], [0], [0], [1], [0, 0, 1, 1], [], []>} : vector<4x4xf32>, vector<4x160xf32>, vector<4x160xf32> -> vector<4x160xf32>
    %55 = vector.broadcast %16 : vector<1x160xf32> to vector<4x160xf32>
    %56 = arith.mulf %54, %55 : vector<4x160xf32>
    %57 = arith.addf %50, %56 : vector<4x160xf32>
    %c0_53 = arith.constant 0 : index
    %c190 = arith.constant 190 : index
    %58 = vector.load %arg10[%c0_53, %c190] : memref<4x480xf32, #tpu.memory_space<vmem>>, vector<4x160xf32>
    %c6 = arith.constant 6 : index
    %c0_54 = arith.constant 0 : index
    %c0_55 = arith.constant 0 : index
    %59 = vector.load %arg4[%c6, %c0_54, %c0_55] : memref<9x4x4xf32, #tpu.memory_space<vmem>>, vector<1x4x4xf32>
    %60 = vector.shape_cast %59 : vector<1x4x4xf32> to vector<4x4xf32>
    %cst_56 = arith.constant dense<0.000000e+00> : vector<4x160xf32>
    %61 = tpu.matmul %60, %58, %cst_56 {dimension_numbers = #tpu.dot_dimension_numbers<[1], [0], [0], [1], [0, 0, 1, 1], [], []>} : vector<4x4xf32>, vector<4x160xf32>, vector<4x160xf32> -> vector<4x160xf32>
    %62 = vector.broadcast %15 : vector<1x160xf32> to vector<4x160xf32>
    %63 = arith.mulf %61, %62 : vector<4x160xf32>
    %64 = arith.addf %57, %63 : vector<4x160xf32>
    %c0_57 = arith.constant 0 : index
    %c192 = arith.constant 192 : index
    %65 = vector.load %arg10[%c0_57, %c192] : memref<4x480xf32, #tpu.memory_space<vmem>>, vector<4x160xf32>
    %c7 = arith.constant 7 : index
    %c0_58 = arith.constant 0 : index
    %c0_59 = arith.constant 0 : index
    %66 = vector.load %arg4[%c7, %c0_58, %c0_59] : memref<9x4x4xf32, #tpu.memory_space<vmem>>, vector<1x4x4xf32>
    %67 = vector.shape_cast %66 : vector<1x4x4xf32> to vector<4x4xf32>
    %cst_60 = arith.constant dense<0.000000e+00> : vector<4x160xf32>
    %68 = tpu.matmul %67, %65, %cst_60 {dimension_numbers = #tpu.dot_dimension_numbers<[1], [0], [0], [1], [0, 0, 1, 1], [], []>} : vector<4x4xf32>, vector<4x160xf32>, vector<4x160xf32> -> vector<4x160xf32>
    %69 = arith.addf %64, %68 : vector<4x160xf32>
    %c0_61 = arith.constant 0 : index
    %c194 = arith.constant 194 : index
    %70 = vector.load %arg10[%c0_61, %c194] : memref<4x480xf32, #tpu.memory_space<vmem>>, vector<4x160xf32>
    %c8 = arith.constant 8 : index
    %c0_62 = arith.constant 0 : index
    %c0_63 = arith.constant 0 : index
    %71 = vector.load %arg4[%c8, %c0_62, %c0_63] : memref<9x4x4xf32, #tpu.memory_space<vmem>>, vector<1x4x4xf32>
    %72 = vector.shape_cast %71 : vector<1x4x4xf32> to vector<4x4xf32>
    %cst_64 = arith.constant dense<0.000000e+00> : vector<4x160xf32>
    %73 = tpu.matmul %72, %70, %cst_64 {dimension_numbers = #tpu.dot_dimension_numbers<[1], [0], [0], [1], [0, 0, 1, 1], [], []>} : vector<4x4xf32>, vector<4x160xf32>, vector<4x160xf32> -> vector<4x160xf32>
    %74 = vector.broadcast %16 : vector<1x160xf32> to vector<4x160xf32>
    %75 = arith.mulf %73, %74 : vector<4x160xf32>
    %76 = arith.addf %69, %75 : vector<4x160xf32>
    %77 = vector.broadcast %13 : vector<4x1xf32> to vector<4x160xf32>
    %78 = arith.addf %76, %77 : vector<4x160xf32>
    %cst_65 = arith.constant 0.000000e+00 : f32
    %79 = vector.broadcast %cst_65 : f32 to vector<4x160xf32>
    %80 = arith.maximumf %78, %79 : vector<4x160xf32>
    %cst_66 = arith.constant 0.000000e+00 : f32
    %81 = vector.broadcast %cst_66 : f32 to vector<4x128xf32>
    %c0_67 = arith.constant 0 : index
    %c0_68 = arith.constant 0 : index
    %82 = vector.load %arg11[%c0_67, %c0_68] : memref<4x416xf32, #tpu.memory_space<vmem>>, vector<4x128xf32>
    tpu.vector_store %arg11[%c0_67, %c0_68], %81 {strides = array<i32>} : memref<4x416xf32, #tpu.memory_space<vmem>>, vector<4x128xf32>,
    %c0_69 = arith.constant 0 : index
    %c128_70 = arith.constant 128 : index
    %83 = vector.load %arg11[%c0_69, %c128_70] : memref<4x416xf32, #tpu.memory_space<vmem>>, vector<4x160xf32>
    tpu.vector_store %arg11[%c0_69, %c128_70], %80 {strides = array<i32>} : memref<4x416xf32, #tpu.memory_space<vmem>>, vector<4x160xf32>,
    %cst_71 = arith.constant 0.000000e+00 : f32
    %84 = vector.broadcast %cst_71 : f32 to vector<4x128xf32>
    %c0_72 = arith.constant 0 : index
    %c288 = arith.constant 288 : index
    %85 = vector.load %arg11[%c0_72, %c288] : memref<4x416xf32, #tpu.memory_space<vmem>>, vector<4x128xf32>
    tpu.vector_store %arg11[%c0_72, %c288], %84 {strides = array<i32>} : memref<4x416xf32, #tpu.memory_space<vmem>>, vector<4x128xf32>,
    %c0_i32 = arith.constant 0 : i32
    %86 = arith.cmpi eq, %arg1, %c0_i32 : i32
    %87 = arith.extui %86 : i1 to i32
    %c0_i32_73 = arith.constant 0 : i32
    %88 = arith.cmpi ne, %87, %c0_i32_73 : i32
    scf.if %88 {
      %cst_127 = arith.constant 0.000000e+00 : f32
      %157 = vector.broadcast %cst_127 : f32 to vector<4x16xf32>
      %c0_128 = arith.constant 0 : index
      %c128_129 = arith.constant 128 : index
      %158 = vector.load %arg11[%c0_128, %c128_129] : memref<4x416xf32, #tpu.memory_space<vmem>>, vector<4x16xf32>
      tpu.vector_store %arg11[%c0_128, %c128_129], %157 {strides = array<i32>} : memref<4x416xf32, #tpu.memory_space<vmem>>, vector<4x16xf32>,
    } else {
    }
    %c1_i32 = arith.constant 1 : i32
    %89 = arith.cmpi eq, %arg1, %c1_i32 : i32
    %90 = arith.extui %89 : i1 to i32
    %c0_i32_74 = arith.constant 0 : i32
    %91 = arith.cmpi ne, %90, %c0_i32_74 : i32
    scf.if %91 {
      %cst_127 = arith.constant 0.000000e+00 : f32
      %157 = vector.broadcast %cst_127 : f32 to vector<4x16xf32>
      %c0_128 = arith.constant 0 : index
      %c272 = arith.constant 272 : index
      %158 = vector.load %arg11[%c0_128, %c272] : memref<4x416xf32, #tpu.memory_space<vmem>>, vector<4x16xf32>
      tpu.vector_store %arg11[%c0_128, %c272], %157 {strides = array<i32>} : memref<4x416xf32, #tpu.memory_space<vmem>>, vector<4x16xf32>,
    } else {
    }
    %cst_75 = arith.constant 0.000000e+00 : f32
    %92 = vector.broadcast %cst_75 : f32 to vector<4x128xf32>
    %c0_76 = arith.constant 0 : index
    %c127 = arith.constant 127 : index
    %93 = vector.load %arg11[%c0_76, %c127] : memref<4x416xf32, #tpu.memory_space<vmem>>, vector<4x128xf32>
    %c0_77 = arith.constant 0 : index
    %c0_78 = arith.constant 0 : index
    %c0_79 = arith.constant 0 : index
    %94 = vector.load %arg5[%c0_77, %c0_78, %c0_79] : memref<9x4x4xf32, #tpu.memory_space<vmem>>, vector<1x4x4xf32>
    %95 = vector.shape_cast %94 : vector<1x4x4xf32> to vector<4x4xf32>
    %cst_80 = arith.constant dense<0.000000e+00> : vector<4x128xf32>
    %96 = tpu.matmul %95, %93, %cst_80 {dimension_numbers = #tpu.dot_dimension_numbers<[1], [0], [0], [1], [0, 0, 1, 1], [], []>} : vector<4x4xf32>, vector<4x128xf32>, vector<4x128xf32> -> vector<4x128xf32>
    %97 = vector.broadcast %17 : vector<1x128xf32> to vector<4x128xf32>
    %98 = arith.mulf %96, %97 : vector<4x128xf32>
    %99 = arith.addf %92, %98 : vector<4x128xf32>
    %c0_81 = arith.constant 0 : index
    %c128_82 = arith.constant 128 : index
    %100 = vector.load %arg11[%c0_81, %c128_82] : memref<4x416xf32, #tpu.memory_space<vmem>>, vector<4x128xf32>
    %c1_83 = arith.constant 1 : index
    %c0_84 = arith.constant 0 : index
    %c0_85 = arith.constant 0 : index
    %101 = vector.load %arg5[%c1_83, %c0_84, %c0_85] : memref<9x4x4xf32, #tpu.memory_space<vmem>>, vector<1x4x4xf32>
    %102 = vector.shape_cast %101 : vector<1x4x4xf32> to vector<4x4xf32>
    %cst_86 = arith.constant dense<0.000000e+00> : vector<4x128xf32>
    %103 = tpu.matmul %102, %100, %cst_86 {dimension_numbers = #tpu.dot_dimension_numbers<[1], [0], [0], [1], [0, 0, 1, 1], [], []>} : vector<4x4xf32>, vector<4x128xf32>, vector<4x128xf32> -> vector<4x128xf32>
    %104 = arith.addf %99, %103 : vector<4x128xf32>
    %c0_87 = arith.constant 0 : index
    %c129 = arith.constant 129 : index
    %105 = vector.load %arg11[%c0_87, %c129] : memref<4x416xf32, #tpu.memory_space<vmem>>, vector<4x128xf32>
    %c2_88 = arith.constant 2 : index
    %c0_89 = arith.constant 0 : index
    %c0_90 = arith.constant 0 : index
    %106 = vector.load %arg5[%c2_88, %c0_89, %c0_90] : memref<9x4x4xf32, #tpu.memory_space<vmem>>, vector<1x4x4xf32>
    %107 = vector.shape_cast %106 : vector<1x4x4xf32> to vector<4x4xf32>
    %cst_91 = arith.constant dense<0.000000e+00> : vector<4x128xf32>
    %108 = tpu.matmul %107, %105, %cst_91 {dimension_numbers = #tpu.dot_dimension_numbers<[1], [0], [0], [1], [0, 0, 1, 1], [], []>} : vector<4x4xf32>, vector<4x128xf32>, vector<4x128xf32> -> vector<4x128xf32>
    %109 = vector.broadcast %18 : vector<1x128xf32> to vector<4x128xf32>
    %110 = arith.mulf %108, %109 : vector<4x128xf32>
    %111 = arith.addf %104, %110 : vector<4x128xf32>
    %c0_92 = arith.constant 0 : index
    %c143 = arith.constant 143 : index
    %112 = vector.load %arg11[%c0_92, %c143] : memref<4x416xf32, #tpu.memory_space<vmem>>, vector<4x128xf32>
    %c3_93 = arith.constant 3 : index
    %c0_94 = arith.constant 0 : index
    %c0_95 = arith.constant 0 : index
    %113 = vector.load %arg5[%c3_93, %c0_94, %c0_95] : memref<9x4x4xf32, #tpu.memory_space<vmem>>, vector<1x4x4xf32>
    %114 = vector.shape_cast %113 : vector<1x4x4xf32> to vector<4x4xf32>
    %cst_96 = arith.constant dense<0.000000e+00> : vector<4x128xf32>
    %115 = tpu.matmul %114, %112, %cst_96 {dimension_numbers = #tpu.dot_dimension_numbers<[1], [0], [0], [1], [0, 0, 1, 1], [], []>} : vector<4x4xf32>, vector<4x128xf32>, vector<4x128xf32> -> vector<4x128xf32>
    %116 = vector.broadcast %17 : vector<1x128xf32> to vector<4x128xf32>
    %117 = arith.mulf %115, %116 : vector<4x128xf32>
    %118 = arith.addf %111, %117 : vector<4x128xf32>
    %c0_97 = arith.constant 0 : index
    %c144 = arith.constant 144 : index
    %119 = vector.load %arg11[%c0_97, %c144] : memref<4x416xf32, #tpu.memory_space<vmem>>, vector<4x128xf32>
    %c4_98 = arith.constant 4 : index
    %c0_99 = arith.constant 0 : index
    %c0_100 = arith.constant 0 : index
    %120 = vector.load %arg5[%c4_98, %c0_99, %c0_100] : memref<9x4x4xf32, #tpu.memory_space<vmem>>, vector<1x4x4xf32>
    %121 = vector.shape_cast %120 : vector<1x4x4xf32> to vector<4x4xf32>
    %cst_101 = arith.constant dense<0.000000e+00> : vector<4x128xf32>
    %122 = tpu.matmul %121, %119, %cst_101 {dimension_numbers = #tpu.dot_dimension_numbers<[1], [0], [0], [1], [0, 0, 1, 1], [], []>} : vector<4x4xf32>, vector<4x128xf32>, vector<4x128xf32> -> vector<4x128xf32>
    %123 = arith.addf %118, %122 : vector<4x128xf32>
    %c0_102 = arith.constant 0 : index
    %c145 = arith.constant 145 : index
    %124 = vector.load %arg11[%c0_102, %c145] : memref<4x416xf32, #tpu.memory_space<vmem>>, vector<4x128xf32>
    %c5_103 = arith.constant 5 : index
    %c0_104 = arith.constant 0 : index
    %c0_105 = arith.constant 0 : index
    %125 = vector.load %arg5[%c5_103, %c0_104, %c0_105] : memref<9x4x4xf32, #tpu.memory_space<vmem>>, vector<1x4x4xf32>
    %126 = vector.shape_cast %125 : vector<1x4x4xf32> to vector<4x4xf32>
    %cst_106 = arith.constant dense<0.000000e+00> : vector<4x128xf32>
    %127 = tpu.matmul %126, %124, %cst_106 {dimension_numbers = #tpu.dot_dimension_numbers<[1], [0], [0], [1], [0, 0, 1, 1], [], []>} : vector<4x4xf32>, vector<4x128xf32>, vector<4x128xf32> -> vector<4x128xf32>
    %128 = vector.broadcast %18 : vector<1x128xf32> to vector<4x128xf32>
    %129 = arith.mulf %127, %128 : vector<4x128xf32>
    %130 = arith.addf %123, %129 : vector<4x128xf32>
    %c0_107 = arith.constant 0 : index
    %c159 = arith.constant 159 : index
    %131 = vector.load %arg11[%c0_107, %c159] : memref<4x416xf32, #tpu.memory_space<vmem>>, vector<4x128xf32>
    %c6_108 = arith.constant 6 : index
    %c0_109 = arith.constant 0 : index
    %c0_110 = arith.constant 0 : index
    %132 = vector.load %arg5[%c6_108, %c0_109, %c0_110] : memref<9x4x4xf32, #tpu.memory_space<vmem>>, vector<1x4x4xf32>
    %133 = vector.shape_cast %132 : vector<1x4x4xf32> to vector<4x4xf32>
    %cst_111 = arith.constant dense<0.000000e+00> : vector<4x128xf32>
    %134 = tpu.matmul %133, %131, %cst_111 {dimension_numbers = #tpu.dot_dimension_numbers<[1], [0], [0], [1], [0, 0, 1, 1], [], []>} : vector<4x4xf32>, vector<4x128xf32>, vector<4x128xf32> -> vector<4x128xf32>
    %135 = vector.broadcast %17 : vector<1x128xf32> to vector<4x128xf32>
    %136 = arith.mulf %134, %135 : vector<4x128xf32>
    %137 = arith.addf %130, %136 : vector<4x128xf32>
    %c0_112 = arith.constant 0 : index
    %c160_113 = arith.constant 160 : index
    %138 = vector.load %arg11[%c0_112, %c160_113] : memref<4x416xf32, #tpu.memory_space<vmem>>, vector<4x128xf32>
    %c7_114 = arith.constant 7 : index
    %c0_115 = arith.constant 0 : index
    %c0_116 = arith.constant 0 : index
    %139 = vector.load %arg5[%c7_114, %c0_115, %c0_116] : memref<9x4x4xf32, #tpu.memory_space<vmem>>, vector<1x4x4xf32>
    %140 = vector.shape_cast %139 : vector<1x4x4xf32> to vector<4x4xf32>
    %cst_117 = arith.constant dense<0.000000e+00> : vector<4x128xf32>
    %141 = tpu.matmul %140, %138, %cst_117 {dimension_numbers = #tpu.dot_dimension_numbers<[1], [0], [0], [1], [0, 0, 1, 1], [], []>} : vector<4x4xf32>, vector<4x128xf32>, vector<4x128xf32> -> vector<4x128xf32>
    %142 = arith.addf %137, %141 : vector<4x128xf32>
    %c0_118 = arith.constant 0 : index
    %c161 = arith.constant 161 : index
    %143 = vector.load %arg11[%c0_118, %c161] : memref<4x416xf32, #tpu.memory_space<vmem>>, vector<4x128xf32>
    %c8_119 = arith.constant 8 : index
    %c0_120 = arith.constant 0 : index
    %c0_121 = arith.constant 0 : index
    %144 = vector.load %arg5[%c8_119, %c0_120, %c0_121] : memref<9x4x4xf32, #tpu.memory_space<vmem>>, vector<1x4x4xf32>
    %145 = vector.shape_cast %144 : vector<1x4x4xf32> to vector<4x4xf32>
    %cst_122 = arith.constant dense<0.000000e+00> : vector<4x128xf32>
    %146 = tpu.matmul %145, %143, %cst_122 {dimension_numbers = #tpu.dot_dimension_numbers<[1], [0], [0], [1], [0, 0, 1, 1], [], []>} : vector<4x4xf32>, vector<4x128xf32>, vector<4x128xf32> -> vector<4x128xf32>
    %147 = vector.broadcast %18 : vector<1x128xf32> to vector<4x128xf32>
    %148 = arith.mulf %146, %147 : vector<4x128xf32>
    %149 = arith.addf %142, %148 : vector<4x128xf32>
    %150 = vector.broadcast %14 : vector<4x1xf32> to vector<4x128xf32>
    %151 = arith.addf %149, %150 : vector<4x128xf32>
    %cst_123 = arith.constant 0.000000e+00 : f32
    %152 = vector.broadcast %cst_123 : f32 to vector<4x128xf32>
    %153 = arith.maximumf %151, %152 : vector<4x128xf32>
    %c0_124 = arith.constant 0 : index
    %c0_125 = arith.constant 0 : index
    %c0_126 = arith.constant 0 : index
    %154 = vector.load %arg9[%c0_124, %c0_125, %c0_126] : memref<1x4x128xf32, #tpu.memory_space<vmem>>, vector<1x4x128xf32>
    %155 = vector.shape_cast %154 : vector<1x4x128xf32> to vector<4x128xf32>
    %156 = vector.shape_cast %153 : vector<4x128xf32> to vector<1x4x128xf32>
    tpu.vector_store %arg9[%c0_124, %c0_125, %c0_126], %156 {strides = array<i32>} : memref<1x4x128xf32, #tpu.memory_space<vmem>>, vector<1x4x128xf32>,
    return
  }
  func.func @transform_0(%arg0: i32, %arg1: i32) -> (i32, i32, i32) {
    %c0_i32 = arith.constant 0 : i32
    %c0_i32_0 = arith.constant 0 : i32
    return %arg0, %c0_i32, %arg1 : i32, i32, i32
  }
  func.func @transform_1(%arg0: i32, %arg1: i32) -> (i32, i32, i32) {
    %c2_i32 = arith.constant 2 : i32
    %0 = arith.muli %arg0, %c2_i32 : i32
    %1 = arith.addi %0, %arg1 : i32
    %c0_i32 = arith.constant 0 : i32
    %c0_i32_0 = arith.constant 0 : i32
    %c0_i32_1 = arith.constant 0 : i32
    return %1, %c0_i32, %c0_i32_0 : i32, i32, i32
  }
  func.func @transform_2(%arg0: i32, %arg1: i32) -> (i32, i32, i32) {
    %c0_i32 = arith.constant 0 : i32
    %c0_i32_0 = arith.constant 0 : i32
    %c0_i32_1 = arith.constant 0 : i32
    %c0_i32_2 = arith.constant 0 : i32
    return %c0_i32, %c0_i32_0, %c0_i32_1 : i32, i32, i32
  }
  func.func @transform_3(%arg0: i32, %arg1: i32) -> (i32, i32, i32) {
    %c0_i32 = arith.constant 0 : i32
    %c0_i32_0 = arith.constant 0 : i32
    %c0_i32_1 = arith.constant 0 : i32
    %c0_i32_2 = arith.constant 0 : i32
    return %c0_i32, %c0_i32_0, %c0_i32_1 : i32, i32, i32
  }
  func.func @transform_4(%arg0: i32, %arg1: i32) -> (i32, i32) {
    %c0_i32 = arith.constant 0 : i32
    %c0_i32_0 = arith.constant 0 : i32
    %c0_i32_1 = arith.constant 0 : i32
    return %c0_i32, %c0_i32_0 : i32, i32
  }
  func.func @transform_5(%arg0: i32, %arg1: i32) -> (i32, i32) {
    %c0_i32 = arith.constant 0 : i32
    %c0_i32_0 = arith.constant 0 : i32
    %c0_i32_1 = arith.constant 0 : i32
    return %c0_i32, %c0_i32_0 : i32, i32
  }
  func.func @transform_6(%arg0: i32, %arg1: i32) -> (i32, i32) {
    %c0_i32 = arith.constant 0 : i32
    %c0_i32_0 = arith.constant 0 : i32
    %c0_i32_1 = arith.constant 0 : i32
    return %c0_i32, %c0_i32_0 : i32, i32
  }
  func.func @transform_7(%arg0: i32, %arg1: i32) -> (i32, i32, i32) {
    %c0_i32 = arith.constant 0 : i32
    %c0_i32_0 = arith.constant 0 : i32
    return %arg0, %c0_i32, %arg1 : i32, i32, i32
  }
}

</mosaic_0001>

<llo_original>
// kernel: dblock_com1_forward.1
$region0: #{dblock_com1_forward.1}
  #allocation0 [shape = 'u32[]', space=smem, size = 0x4, offset = 0x4, fixed_abs, tag = 'smem constant byte address 0x4 - core index']
  #allocation1 [shape = 'u32[72,128]{1,0:T(1,128)}', space=vmem, size = 0x9000, scoped, tag = 'internal scratch']
  #allocation2 [shape = 'f32[4,480]{1,0:T(4,128)}', space=vmem, size = 0x2000, scoped, tag = 'scratch operand']
  #allocation3 [shape = 'f32[4,416]{1,0:T(4,128)}', space=vmem, size = 0x2000, scoped, tag = 'scratch operand']
  %s0 = inlined_call_operand.vmem [shape: f32[2,4,256], index: 0, kind: input, shape index: {}]
  %s1 = inlined_call_operand.vmem [shape: f32[4,4,96], index: 1, kind: input, shape index: {}]
  %s2 = inlined_call_operand.vmem [shape: f32[9,4,4], index: 2, kind: input, shape index: {}]
  %s3 = inlined_call_operand.vmem [shape: f32[9,4,4], index: 3, kind: input, shape index: {}]
  %s4 = inlined_call_operand.vmem [shape: f32[4,1], index: 4, kind: input, shape index: {}]
  %s5 = inlined_call_operand.vmem [shape: f32[4,1], index: 5, kind: input, shape index: {}]
  %s6 = inlined_call_operand.vmem [shape: f32[4,160], index: 6, kind: input, shape index: {}]
  %s7 = inlined_call_operand.vmem [shape: f32[2,4,256], index: 7, kind: output, shape index: {}]
  %s8 = sld [smem:[#allocation0]]
  $region69: #{dblock_com1_forward.1} parent=0
    _
  %s10 = ssub.s32 1, %s8
  %s11 = scalar_select 0, %s10, %s8
  loop: start=0, step=1, limit=6
  $region2: #{dblock_com1_forward.1} parent=0 // loop_pre_header
    _
  $region3: #{dblock_com1_forward.1} parent=0 // loop_header
    %s13 = sphi 0, %s17
    %p14 = scmp.ge.s32.totalorder %s13, 6
    %s20 = sphi 0, %s32
    %s21 = sphi 0, %s28
    %s22 = sphi 0, %s20
    %s23 = sphi 0, %s21
    %s24 = sphi 0, %s22
    %s25 = sphi 0, %s23
    %s37 = sphi 0, %s39
    %s40 = sphi 0, %s37
    %s41 = sphi 0, %s40
    %s57 = sphi 0, %s41
    %s67 = sphi 0, %s69
    %s70 = sphi 0, %s67
    %s71 = sphi 0, %s70
    %s87 = sphi 0, %s71
    %s91 = sphi 0, %s91
    %s93 = sphi 0, %s91
    %s94 = sphi 0, %s93
    %s108 = sphi 0, %s94
    %s112 = sphi 0, %s112
    %s114 = sphi 0, %s112
    %s115 = sphi 0, %s114
    %s129 = sphi 0, %s115
    %s133 = sphi 0, %s133
    %s135 = sphi 0, %s133
    %s136 = sphi 0, %s135
    %s150 = sphi 0, %s136
    %s154 = sphi 0, %s154
    %s156 = sphi 0, %s154
    %s157 = sphi 0, %s156
    %s171 = sphi 0, %s157
    %s175 = sphi 0, %s175
    %s177 = sphi 0, %s175
    %s178 = sphi 0, %s177
    %s192 = sphi 0, %s178
    %s200 = sphi 0, %s202
    %s203 = sphi 0, %s200
    %s204 = sphi 0, %s203
    %s220 = sphi 0, %s204
  $region4: #{dblock_com1_forward.1} parent=0 // loop_header_branch
    %16 = sbr.rel (%p14) target = $region8
  $region5: #{dblock_com1_forward.1} parent=0 // loop_body
    %s18 = ssub.s32 %s13, 1
    %s19 = ssub.s32 %s13, 2
    %s26 = sadd.s32 1, %s21
    %p27 = scmp.ge.s32.totalorder %s26, 2
    %s28 = scalar_select %p27, 0, %s26
    %s29 = sadd.s32 1, %s20
    %s30 = scalar_select %p27, %s29, %s20
    %p31 = scmp.ge.s32.totalorder %s30, 2
    %s32 = scalar_select %p31, 0, %s30
    %s33 = ssub.s32 %s20, %s32
    %s34 = ssub.s32 %s21, %s28
    %s35 = sor.u32 %s33, %s34
    %p36 = scmp.eq.s32.totalorder %s35, 0
    %s38 = sadd.s32 %s37, 1
    %s39 = scalar_select %p36, %s37, %s38
    %p42 = pneg %p36
    %p43 = scmp.eq.s32.totalorder %s13, 3
    %p44 = por %p42, %p43
    %p45 = scmp.ne.s32.totalorder %s37, %s40
    %p46 = scmp.eq.s32.totalorder %s13, 0
    %p47 = por %p45, %p46
    %p48 = scmp.ne.s32.totalorder %s37, %s40
    %p49 = scmp.eq.s32.totalorder %s18, 3
    %p50 = por %p48, %p49
    %p51 = scmp.ne.s32.totalorder %s40, %s41
    %p52 = scmp.eq.s32.totalorder %s18, 0
    %p53 = por %p51, %p52
    %p54 = scmp.ne.s32.totalorder %s40, %s41
    %p55 = scmp.eq.s32.totalorder %s19, 3
    %p56 = por %p54, %p55
    %p58 = scmp.ne.s32.totalorder %s41, %s57
    %p59 = scmp.eq.s32.totalorder %s19, 0
    %p60 = por %p58, %p59
    %s61 = smul.u32 %s20, 2
    %s62 = sadd.s32 %s61, %s21
    %s63 = smul.u32 %s32, 2
    %s64 = sadd.s32 %s63, %s28
    %s65 = ssub.s32 %s62, %s64
    %p66 = scmp.eq.s32.totalorder %s65, 0
    %s68 = sadd.s32 %s67, 1
    %s69 = scalar_select %p66, %s67, %s68
    %p72 = pneg %p66
    %p73 = scmp.eq.s32.totalorder %s13, 3
    %p74 = por %p72, %p73
    %p75 = scmp.ne.s32.totalorder %s67, %s70
    %p76 = scmp.eq.s32.totalorder %s13, 0
    %p77 = por %p75, %p76
    %p78 = scmp.ne.s32.totalorder %s67, %s70
    %p79 = scmp.eq.s32.totalorder %s18, 3
    %p80 = por %p78, %p79
    %p81 = scmp.ne.s32.totalorder %s70, %s71
    %p82 = scmp.eq.s32.totalorder %s18, 0
    %p83 = por %p81, %p82
    %p84 = scmp.ne.s32.totalorder %s70, %s71
    %p85 = scmp.eq.s32.totalorder %s19, 3
    %p86 = por %p84, %p85
    %p88 = scmp.ne.s32.totalorder %s71, %s87
    %p89 = scmp.eq.s32.totalorder %s19, 0
    %p90 = por %p88, %p89
    %s92 = sadd.s32 %s91, 1
    %p95 = scmp.eq.s32.totalorder %s13, 3
    %p96 = scmp.ne.s32.totalorder %s91, %s93
    %p97 = scmp.eq.s32.totalorder %s13, 0
    %p98 = por %p96, %p97
    %p99 = scmp.ne.s32.totalorder %s91, %s93
    %p100 = scmp.eq.s32.totalorder %s18, 3
    %p101 = por %p99, %p100
    %p102 = scmp.ne.s32.totalorder %s93, %s94
    %p103 = scmp.eq.s32.totalorder %s18, 0
    %p104 = por %p102, %p103
    %p105 = scmp.ne.s32.totalorder %s93, %s94
    %p106 = scmp.eq.s32.totalorder %s19, 3
    %p107 = por %p105, %p106
    %p109 = scmp.ne.s32.totalorder %s94, %s108
    %p110 = scmp.eq.s32.totalorder %s19, 0
    %p111 = por %p109, %p110
    %s113 = sadd.s32 %s112, 1
    %p116 = scmp.eq.s32.totalorder %s13, 3
    %p117 = scmp.ne.s32.totalorder %s112, %s114
    %p118 = scmp.eq.s32.totalorder %s13, 0
    %p119 = por %p117, %p118
    %p120 = scmp.ne.s32.totalorder %s112, %s114
    %p121 = scmp.eq.s32.totalorder %s18, 3
    %p122 = por %p120, %p121
    %p123 = scmp.ne.s32.totalorder %s114, %s115
    %p124 = scmp.eq.s32.totalorder %s18, 0
    %p125 = por %p123, %p124
    %p126 = scmp.ne.s32.totalorder %s114, %s115
    %p127 = scmp.eq.s32.totalorder %s19, 3
    %p128 = por %p126, %p127
    %p130 = scmp.ne.s32.totalorder %s115, %s129
    %p131 = scmp.eq.s32.totalorder %s19, 0
    %p132 = por %p130, %p131
    %s134 = sadd.s32 %s133, 1
    %p137 = scmp.eq.s32.totalorder %s13, 3
    %p138 = scmp.ne.s32.totalorder %s133, %s135
    %p139 = scmp.eq.s32.totalorder %s13, 0
    %p140 = por %p138, %p139
    %p141 = scmp.ne.s32.totalorder %s133, %s135
    %p142 = scmp.eq.s32.totalorder %s18, 3
    %p143 = por %p141, %p142
    %p144 = scmp.ne.s32.totalorder %s135, %s136
    %p145 = scmp.eq.s32.totalorder %s18, 0
    %p146 = por %p144, %p145
    %p147 = scmp.ne.s32.totalorder %s135, %s136
    %p148 = scmp.eq.s32.totalorder %s19, 3
    %p149 = por %p147, %p148
    %p151 = scmp.ne.s32.totalorder %s136, %s150
    %p152 = scmp.eq.s32.totalorder %s19, 0
    %p153 = por %p151, %p152
    %s155 = sadd.s32 %s154, 1
    %p158 = scmp.eq.s32.totalorder %s13, 3
    %p159 = scmp.ne.s32.totalorder %s154, %s156
    %p160 = scmp.eq.s32.totalorder %s13, 0
    %p161 = por %p159, %p160
    %p162 = scmp.ne.s32.totalorder %s154, %s156
    %p163 = scmp.eq.s32.totalorder %s18, 3
    %p164 = por %p162, %p163
    %p165 = scmp.ne.s32.totalorder %s156, %s157
    %p166 = scmp.eq.s32.totalorder %s18, 0
    %p167 = por %p165, %p166
    %p168 = scmp.ne.s32.totalorder %s156, %s157
    %p169 = scmp.eq.s32.totalorder %s19, 3
    %p170 = por %p168, %p169
    %p172 = scmp.ne.s32.totalorder %s157, %s171
    %p173 = scmp.eq.s32.totalorder %s19, 0
    %p174 = por %p172, %p173
    %s176 = sadd.s32 %s175, 1
    %p179 = scmp.eq.s32.totalorder %s13, 3
    %p180 = scmp.ne.s32.totalorder %s175, %s177
    %p181 = scmp.eq.s32.totalorder %s13, 0
    %p182 = por %p180, %p181
    %p183 = scmp.ne.s32.totalorder %s175, %s177
    %p184 = scmp.eq.s32.totalorder %s18, 3
    %p185 = por %p183, %p184
    %p186 = scmp.ne.s32.totalorder %s177, %s178
    %p187 = scmp.eq.s32.totalorder %s18, 0
    %p188 = por %p186, %p187
    %p189 = scmp.ne.s32.totalorder %s177, %s178
    %p190 = scmp.eq.s32.totalorder %s19, 3
    %p191 = por %p189, %p190
    %p193 = scmp.ne.s32.totalorder %s178, %s192
    %p194 = scmp.eq.s32.totalorder %s19, 0
    %p195 = por %p193, %p194
    %s196 = ssub.s32 %s20, %s32
    %s197 = ssub.s32 %s21, %s28
    %s198 = sor.u32 %s196, %s197
    %p199 = scmp.eq.s32.totalorder %s198, 0
    %s201 = sadd.s32 %s200, 1
    %s202 = scalar_select %p199, %s200, %s201
    %p205 = pneg %p199
    %p206 = scmp.eq.s32.totalorder %s13, 3
    %p207 = por %p205, %p206
    %p208 = scmp.ne.s32.totalorder %s200, %s203
    %p209 = scmp.eq.s32.totalorder %s13, 0
    %p210 = por %p208, %p209
    %p211 = scmp.ne.s32.totalorder %s200, %s203
    %p212 = scmp.eq.s32.totalorder %s18, 3
    %p213 = por %p211, %p212
    %p214 = scmp.ne.s32.totalorder %s203, %s204
    %p215 = scmp.eq.s32.totalorder %s18, 0
    %p216 = por %p214, %p215
    %p217 = scmp.ne.s32.totalorder %s203, %s204
    %p218 = scmp.eq.s32.totalorder %s19, 3
    %p219 = por %p217, %p218
    %p221 = scmp.ne.s32.totalorder %s204, %s220
    %p222 = scmp.eq.s32.totalorder %s19, 0
    %p223 = por %p221, %p222
    %p224 = scmp.le.s32.totalorder 1, %s13
    %p225 = scmp.lt.s32.totalorder %s13, 5
    %p226 = pnand %p224, %p225
    %p227 = pneg %p226
    // Predicated region
    $region9: #{dblock_com1_forward.1} parent=5 // pred_check
      _
    $region10: #{dblock_com1_forward.1} parent=5 // pred_check_branch
      %229 = sbr.rel (%p226) target = $region12
    $region11: #{dblock_com1_forward.1} parent=5 // pred_region
      %s230 = ssub.s32 %s13, 1
      // Predicated region
      $region13: #{dblock_com1_forward.1} parent=11 // pred_check
        %p231 = pneg %p104
      $region14: #{dblock_com1_forward.1} parent=11 // pred_check_branch
        %233 = sbr.rel (%p231) target = $region16
      $region15: #{dblock_com1_forward.1} parent=11 // pred_region
        _
      $region16: #{dblock_com1_forward.1} parent=11 // pred_fallthru
        _
      // Predicated region
      $region17: #{dblock_com1_forward.1} parent=11 // pred_check
        %p234 = pneg %p125
      $region18: #{dblock_com1_forward.1} parent=11 // pred_check_branch
        %236 = sbr.rel (%p234) target = $region20
      $region19: #{dblock_com1_forward.1} parent=11 // pred_region
        _
      $region20: #{dblock_com1_forward.1} parent=11 // pred_fallthru
        _
      // Predicated region
      $region21: #{dblock_com1_forward.1} parent=11 // pred_check
        %p237 = pneg %p146
      $region22: #{dblock_com1_forward.1} parent=11 // pred_check_branch
        %239 = sbr.rel (%p237) target = $region24
      $region23: #{dblock_com1_forward.1} parent=11 // pred_region
        _
      $region24: #{dblock_com1_forward.1} parent=11 // pred_fallthru
        _
      // Predicated region
      $region25: #{dblock_com1_forward.1} parent=11 // pred_check
        %p240 = pneg %p167
      $region26: #{dblock_com1_forward.1} parent=11 // pred_check_branch
        %242 = sbr.rel (%p240) target = $region28
      $region27: #{dblock_com1_forward.1} parent=11 // pred_region
        _
      $region28: #{dblock_com1_forward.1} parent=11 // pred_fallthru
        _
      // Predicated region
      $region29: #{dblock_com1_forward.1} parent=11 // pred_check
        %p243 = pneg %p188
      $region30: #{dblock_com1_forward.1} parent=11 // pred_check_branch
        %245 = sbr.rel (%p243) target = $region32
      $region31: #{dblock_com1_forward.1} parent=11 // pred_region
        _
      $region32: #{dblock_com1_forward.1} parent=11 // pred_fallthru
        _
    $region12: #{dblock_com1_forward.1} parent=5 // pred_fallthru
      _
    %p246 = scmp.lt.s32.totalorder %s13, 4
    // Predicated region
    $region33: #{dblock_com1_forward.1} parent=5 // pred_check
      %p247 = pneg %p246
    $region34: #{dblock_com1_forward.1} parent=5 // pred_check_branch
      %249 = sbr.rel (%p247) target = $region36
    $region35: #{dblock_com1_forward.1} parent=5 // pred_region
      // Predicated region
      $region37: #{dblock_com1_forward.1} parent=35 // pred_check
        %p250 = pneg %p47
      $region38: #{dblock_com1_forward.1} parent=35 // pred_check_branch
        %252 = sbr.rel (%p250) target = $region40
      $region39: #{dblock_com1_forward.1} parent=35 // pred_region
        %p253 = scmp.lt.s32.totalorder %s20, 1
        %s254 = scalar_select %p253, %s20, 1
        %p255 = scmp.lt.s32.totalorder %s21, 1
        %s256 = scalar_select %p255, %s21, 1
        %s257 = smul.addr %s254, 2
        %s258 = sadd.s32 %s256, %s257
        %s259 = smul.addr %s258, 4
        %s260 = scalar_lea.vmem %s0, %s259
      $region40: #{dblock_com1_forward.1} parent=35 // pred_fallthru
        _
      // Predicated region
      $region41: #{dblock_com1_forward.1} parent=35 // pred_check
        %p261 = pneg %p77
      $region42: #{dblock_com1_forward.1} parent=35 // pred_check_branch
        %263 = sbr.rel (%p261) target = $region44
      $region43: #{dblock_com1_forward.1} parent=35 // pred_region
        %s264 = smul.u32 %s20, 2
        %s265 = sadd.s32 %s264, %s21
        %p266 = scmp.lt.s32.totalorder %s265, 3
        %s267 = scalar_select %p266, %s265, 3
        %s268 = smul.addr %s267, 4
        %s269 = scalar_lea.vmem %s1, %s268
        %s270 = smul.u32 %s20, 2
        %s271 = sadd.s32 %s270, %s21
      $region44: #{dblock_com1_forward.1} parent=35 // pred_fallthru
        _
    $region36: #{dblock_com1_forward.1} parent=5 // pred_fallthru
      _
    %p272 = scmp.le.s32.totalorder 1, %s13
    %p273 = scmp.lt.s32.totalorder %s13, 5
    %p274 = pnand %p272, %p273
    %p275 = pneg %p274
    // Predicated region
    $region45: #{dblock_com1_forward.1} parent=5 // pred_check
      _
    $region46: #{dblock_com1_forward.1} parent=5 // pred_check_branch
      %277 = sbr.rel (%p274) target = $region48
    $region47: #{dblock_com1_forward.1} parent=5 // pred_region
      %s278 = ssub.s32 %s13, 1
      %p279 = scmp.lt.s32.totalorder %s22, 1
      %s280 = scalar_select %p279, %s22, 1
      %p281 = scmp.lt.s32.totalorder %s23, 1
      %s282 = scalar_select %p281, %s23, 1
      %s283 = smul.addr %s280, 2
      %s284 = sadd.s32 %s282, %s283
      %s285 = smul.addr %s284, 4
      %s286 = scalar_lea.vmem %s0, %s285
      %p287 = pneg %p53
      %p288 = pneg %p50
      %s289 = smul.u32 %s22, 2
      %s290 = sadd.s32 %s289, %s23
      %p291 = scmp.lt.s32.totalorder %s290, 3
      %s292 = scalar_select %p291, %s290, 3
      %s293 = smul.addr %s292, 4
      %s294 = scalar_lea.vmem %s1, %s293
      %p295 = pneg %p83
      %p296 = pneg %p80
      %p297 = pneg %p104
      %p298 = pneg %p101
      %p299 = pneg %p125
      %p300 = pneg %p122
      %p301 = pneg %p146
      %p302 = pneg %p143
      %p303 = pneg %p167
      %p304 = pneg %p164
      %p305 = pneg %p188
      %p306 = pneg %p185
      %p307 = pneg %p216
      %p308 = pneg %p213
      %p309 = scmp.lt.s32.totalorder %s22, 1
      %s310 = scalar_select %p309, %s22, 1
      %p311 = scmp.lt.s32.totalorder %s23, 1
      %s312 = scalar_select %p311, %s23, 1
      %s313 = smul.addr %s310, 2
      %s314 = sadd.s32 %s312, %s313
      %s315 = smul.addr %s314, 4
      %s316 = scalar_lea.vmem %s7, %s315
      %p317 = scmp.lt.s32.totalorder %s22, 1
      %s318 = scalar_select %p317, %s22, 1
      %p319 = scmp.lt.s32.totalorder %s23, 1
      %s320 = scalar_select %p319, %s23, 1
      %s321 = smul.addr %s318, 2
      %s322 = sadd.s32 %s320, %s321
      %s323 = smul.addr %s322, 4
      %s324 = scalar_lea.vmem %s0, %s323
      %s325 = smul.u32 %s22, 2
      %s326 = sadd.s32 %s325, %s23
      %p327 = scmp.lt.s32.totalorder %s326, 3
      %s328 = scalar_select %p327, %s326, 3
      %s329 = smul.addr %s328, 4
      %s330 = scalar_lea.vmem %s1, %s329
      %s331 = smul.u32 %s22, 2
      %s332 = sadd.s32 %s331, %s23
      %p333 = scmp.lt.s32.totalorder %s22, 1
      %s334 = scalar_select %p333, %s22, 1
      %p335 = scmp.lt.s32.totalorder %s23, 1
      %s336 = scalar_select %p335, %s23, 1
      %s337 = smul.addr %s334, 2
      %s338 = sadd.s32 %s336, %s337
      %s339 = smul.addr %s338, 4
      %s340 = scalar_lea.vmem %s7, %s339
      %341 = vst [vmem:[#allocation2] sm:$0xf] 0.0
      %v342 = vld [vmem:[%s330] sm:$0xf]
      %vm343 = vcmask 388096
      %344 = vst.msk [vmem:[#allocation2 + $0x4] sm:$0xf] %vm343, %v342
      %v345 = vld [vmem:[%s324] sm:$0xf]
      %347 = vrot.lane.b32.xlu0 %v345, 48
      %v348 = vpop.permute.xlu0 %347
      %v349 = vrot.slane %v348, 4
      %vm350 = vcmask 392192
      %v351 = vsel %vm350, %v349, %v348
      %vm353 = vcmask 1043840
      %vm354 = vcmask 392196
      %vm355 = vmor %vm354, %vm353
      %356 = vst.msk [vmem:[#allocation2 + $0x4] sm:$0xff] %vm355, %v351
      %v357 = vld [vmem:[%s330] sm:$0xf]
      %vm358 = vcmask 781696
      %359 = vst.msk [vmem:[#allocation2 + $0x8] sm:$0xf] %vm358, %v357
      %vm360 = vcmask 1044224
      %vm361 = vcmask 785412
      %vm362 = vmor %vm361, %vm360
      %363 = vst.msk [vmem:[#allocation2 + $0x8] sm:$0xff] %vm362, 0.0
      %v364 = vld [vmem:[%s4] sm:$0xf]
      %v365 = vld [vmem:[%s5] sm:$0xf]
      %v366 = vld [vmem:[%s6] ss:$4 sm:$0x3]
      %s367 = scalar_lea.vmem %s6, 1
      %v368 = vld [vmem:[%s367] ss:$4 sm:$0x3]
      %v369 = vld [vmem:[%s6 + $0x2] sm:$0x1]
      %v370 = vld [vmem:[%s6 + $0x3] sm:$0x1]
      %v371 = vld [vmem:[#allocation2] sm:$0xff]
      %v372 = vld [vmem:[#allocation2 + $0x8] sm:$0xf]
      %v373 = vld [vmem:[%s2] sm:$0xf]
      %376 = vst [vmem:[#allocation1] ss:$2 sm:$0xff] %v371
      %s377 = scalar_lea.vmem [#allocation1], 16
      %378 = vst [vmem:[%s377] ss:$2 sm:$0xff] %v372
      %v379 = vld.sshfl [vmem:[#allocation1] sm:$0xff pattern:$0x75316420]
      %v380 = vld.sshfl [vmem:[#allocation1 + $0x8] sm:$0xff pattern:$0x75316420]
      %v381 = vld.sshfl [vmem:[#allocation1 + $0x10] sm:$0xff pattern:$0x75316420]
      %382 = vrot.lane.b32.xlu0 %v379, 2
      %v383 = vpop.permute.xlu0 %382
      %384 = vrot.lane.b32.xlu0 %v380, 2
      %v385 = vpop.permute.xlu0 %384
      %386 = vrot.lane.b32.xlu0 %v381, 2
      %v387 = vpop.permute.xlu0 %386
      %vm388 = vcmask 15360
      %v389 = vsel %vm388, %v383, %v385
      %v390 = vsel %vm388, %v385, %v387
      %vm391 = vcmask 31744
      %v393 = vsel %vm391, %v373, 0
      %vm395 = vcmask 1043456
      %v396 = vsel %vm395, %v389, 0
      %v398 = vsel %vm395, %v390, 0
      %400 = vmatpush.msra.mxu0 0.0
      %401 = vmatpush.msra.mxu0 0.0
      %402 = vmatpush.msra.mxu0 0.0
      %403 = vmatpush.msra.mxu0 0.0
      %404 = vmatpush.msra.mxu0 0.0
      %405 = vmatpush.msra.mxu0 0.0
      %406 = vmatpush.msra.mxu0 0.0
      %407 = vmatpush.msra.mxu0 0.0
      %408 = vmatpush.msra.mxu0 0.0
      %409 = vmatpush.msra.mxu0 0.0
      %410 = vmatpush.msra.mxu0 0.0
      %411 = vmatpush.msra.mxu0 0.0
      %412 = vmatpush.msra.mxu0 0.0
      %413 = vmatpush.msra.mxu0 0.0
      %414 = vmatpush.msra.mxu0 0.0
      %415 = vmatpush.msra.mxu0 %v396
      %416 = vmatmul.f32.gmra.mxu0 %v393
      %v417 = vpop.f32.mrf.mxu0
      %v418 = vadd.f32 0.0, %v417
      %419 = vdwg.mxu0
      %420 = vmatpush.msra.mxu0 0.0
      %421 = vmatpush.msra.mxu0 0.0
      %422 = vmatpush.msra.mxu0 0.0
      %423 = vmatpush.msra.mxu0 0.0
      %424 = vmatpush.msra.mxu0 0.0
      %425 = vmatpush.msra.mxu0 0.0
      %426 = vmatpush.msra.mxu0 0.0
      %427 = vmatpush.msra.mxu0 0.0
      %428 = vmatpush.msra.mxu0 0.0
      %429 = vmatpush.msra.mxu0 0.0
      %430 = vmatpush.msra.mxu0 0.0
      %431 = vmatpush.msra.mxu0 0.0
      %432 = vmatpush.msra.mxu0 0.0
      %433 = vmatpush.msra.mxu0 0.0
      %434 = vmatpush.msra.mxu0 0.0
      %435 = vmatpush.msra.mxu0 %v398
      %436 = vmatmul.f32.gmra.mxu0 %v393
      %v437 = vpop.f32.mrf.mxu0
      %v438 = vadd.f32 0.0, %v437
      %439 = vdwg.mxu0
      %v441 = vperm.slane %v366, 0
      %v442 = vperm.slane %v366, 1
      %v445 = vmul.f32 %v418, %v441
      %v446 = vmul.f32 %v438, %v442
      %v447 = vadd.f32 %v445, 0.0
      %v448 = vadd.f32 %v446, 0.0
      %v449 = vld [vmem:[#allocation2 + $0x4] sm:$0xff]
      %s450 = scalar_lea.vmem %s2, 4
      %v451 = vld [vmem:[%s450] sm:$0xf]
      %453 = vst [vmem:[#allocation1] ss:$2 sm:$0xff] %v449
      %v454 = vld.sshfl [vmem:[#allocation1] sm:$0xff pattern:$0x75316420]
      %v455 = vld.sshfl [vmem:[#allocation1 + $0x8] sm:$0xff pattern:$0x75316420]
      %v457 = vsel %vm391, %v451, 0
      %v459 = vsel %vm395, %v454, 0
      %v461 = vsel %vm395, %v455, 0
      %463 = vmatpush.msra.mxu0 0.0
      %464 = vmatpush.msra.mxu0 0.0
      %465 = vmatpush.msra.mxu0 0.0
      %466 = vmatpush.msra.mxu0 0.0
      %467 = vmatpush.msra.mxu0 0.0
      %468 = vmatpush.msra.mxu0 0.0
      %469 = vmatpush.msra.mxu0 0.0
      %470 = vmatpush.msra.mxu0 0.0
      %471 = vmatpush.msra.mxu0 0.0
      %472 = vmatpush.msra.mxu0 0.0
      %473 = vmatpush.msra.mxu0 0.0
      %474 = vmatpush.msra.mxu0 0.0
      %475 = vmatpush.msra.mxu0 0.0
      %476 = vmatpush.msra.mxu0 0.0
      %477 = vmatpush.msra.mxu0 0.0
      %478 = vmatpush.msra.mxu0 %v459
      %479 = vmatmul.f32.gmra.mxu0 %v457
      %v480 = vpop.f32.mrf.mxu0
      %v481 = vadd.f32 0.0, %v480
      %482 = vdwg.mxu0
      %483 = vmatpush.msra.mxu0 0.0
      %484 = vmatpush.msra.mxu0 0.0
      %485 = vmatpush.msra.mxu0 0.0
      %486 = vmatpush.msra.mxu0 0.0
      %487 = vmatpush.msra.mxu0 0.0
      %488 = vmatpush.msra.mxu0 0.0
      %489 = vmatpush.msra.mxu0 0.0
      %490 = vmatpush.msra.mxu0 0.0
      %491 = vmatpush.msra.mxu0 0.0
      %492 = vmatpush.msra.mxu0 0.0
      %493 = vmatpush.msra.mxu0 0.0
      %494 = vmatpush.msra.mxu0 0.0
      %495 = vmatpush.msra.mxu0 0.0
      %496 = vmatpush.msra.mxu0 0.0
      %497 = vmatpush.msra.mxu0 0.0
      %498 = vmatpush.msra.mxu0 %v461
      %499 = vmatmul.f32.gmra.mxu0 %v457
      %v500 = vpop.f32.mrf.mxu0
      %v501 = vadd.f32 0.0, %v500
      %502 = vdwg.mxu0
      %v503 = vadd.f32 %v447, %v481
      %v504 = vadd.f32 %v448, %v501
      %v505 = vld [vmem:[#allocation2 + $0x4] sm:$0xff]
      %s506 = scalar_lea.vmem %s2, 8
      %v507 = vld [vmem:[%s506] sm:$0xf]
      %509 = vst [vmem:[#allocation1] ss:$2 sm:$0xff] %v505
      %v510 = vld.sshfl [vmem:[#allocation1] sm:$0xff pattern:$0x75316420]
      %v511 = vld.sshfl [vmem:[#allocation1 + $0x8] sm:$0xff pattern:$0x75316420]
      %512 = vrot.lane.b32.xlu0 %v510, 126
      %v513 = vpop.permute.xlu0 %512
      %514 = vrot.lane.b32.xlu0 %v511, 126
      %v515 = vpop.permute.xlu0 %514
      %vm516 = vcmask 1031168
      %v517 = vsel %vm516, %v513, %v515
      %v519 = vsel %vm391, %v507, 0
      %v521 = vsel %vm395, %v517, 0
      %v523 = vsel %vm395, %v515, 0
      %525 = vmatpush.msra.mxu0 0.0
      %526 = vmatpush.msra.mxu0 0.0
      %527 = vmatpush.msra.mxu0 0.0
      %528 = vmatpush.msra.mxu0 0.0
      %529 = vmatpush.msra.mxu0 0.0
      %530 = vmatpush.msra.mxu0 0.0
      %531 = vmatpush.msra.mxu0 0.0
      %532 = vmatpush.msra.mxu0 0.0
      %533 = vmatpush.msra.mxu0 0.0
      %534 = vmatpush.msra.mxu0 0.0
      %535 = vmatpush.msra.mxu0 0.0
      %536 = vmatpush.msra.mxu0 0.0
      %537 = vmatpush.msra.mxu0 0.0
      %538 = vmatpush.msra.mxu0 0.0
      %539 = vmatpush.msra.mxu0 0.0
      %540 = vmatpush.msra.mxu0 %v521
      %541 = vmatmul.f32.gmra.mxu0 %v519
      %v542 = vpop.f32.mrf.mxu0
      %v543 = vadd.f32 0.0, %v542
      %544 = vdwg.mxu0
      %545 = vmatpush.msra.mxu0 0.0
      %546 = vmatpush.msra.mxu0 0.0
      %547 = vmatpush.msra.mxu0 0.0
      %548 = vmatpush.msra.mxu0 0.0
      %549 = vmatpush.msra.mxu0 0.0
      %550 = vmatpush.msra.mxu0 0.0
      %551 = vmatpush.msra.mxu0 0.0
      %552 = vmatpush.msra.mxu0 0.0
      %553 = vmatpush.msra.mxu0 0.0
      %554 = vmatpush.msra.mxu0 0.0
      %555 = vmatpush.msra.mxu0 0.0
      %556 = vmatpush.msra.mxu0 0.0
      %557 = vmatpush.msra.mxu0 0.0
      %558 = vmatpush.msra.mxu0 0.0
      %559 = vmatpush.msra.mxu0 0.0
      %560 = vmatpush.msra.mxu0 %v523
      %561 = vmatmul.f32.gmra.mxu0 %v519
      %v562 = vpop.f32.mrf.mxu0
      %v563 = vadd.f32 0.0, %v562
      %564 = vdwg.mxu0
      %v566 = vperm.slane %v368, 0
      %v567 = vperm.slane %v368, 1
      %v570 = vmul.f32 %v543, %v566
      %v571 = vmul.f32 %v563, %v567
      %v572 = vadd.f32 %v503, %v570
      %v573 = vadd.f32 %v504, %v571
      %v574 = vld [vmem:[#allocation2 + $0x4] sm:$0xff]
      %s575 = scalar_lea.vmem %s2, 12
      %v576 = vld [vmem:[%s575] sm:$0xf]
      %578 = vst [vmem:[#allocation1] ss:$2 sm:$0xff] %v574
      %v579 = vld.sshfl [vmem:[#allocation1] sm:$0xff pattern:$0x75316420]
      %v580 = vld.sshfl [vmem:[#allocation1 + $0x8] sm:$0xff pattern:$0x75316420]
      %581 = vrot.lane.b32.xlu0 %v579, 98
      %v582 = vpop.permute.xlu0 %581
      %583 = vrot.lane.b32.xlu0 %v580, 98
      %v584 = vpop.permute.xlu0 %583
      %vm585 = vcmask 801792
      %v586 = vsel %vm585, %v582, %v584
      %v588 = vsel %vm391, %v576, 0
      %v590 = vsel %vm395, %v586, 0
      %v592 = vsel %vm395, %v584, 0
      %594 = vmatpush.msra.mxu0 0.0
      %595 = vmatpush.msra.mxu0 0.0
      %596 = vmatpush.msra.mxu0 0.0
      %597 = vmatpush.msra.mxu0 0.0
      %598 = vmatpush.msra.mxu0 0.0
      %599 = vmatpush.msra.mxu0 0.0
      %600 = vmatpush.msra.mxu0 0.0
      %601 = vmatpush.msra.mxu0 0.0
      %602 = vmatpush.msra.mxu0 0.0
      %603 = vmatpush.msra.mxu0 0.0
      %604 = vmatpush.msra.mxu0 0.0
      %605 = vmatpush.msra.mxu0 0.0
      %606 = vmatpush.msra.mxu0 0.0
      %607 = vmatpush.msra.mxu0 0.0
      %608 = vmatpush.msra.mxu0 0.0
      %609 = vmatpush.msra.mxu0 %v590
      %610 = vmatmul.f32.gmra.mxu0 %v588
      %v611 = vpop.f32.mrf.mxu0
      %v612 = vadd.f32 0.0, %v611
      %613 = vdwg.mxu0
      %614 = vmatpush.msra.mxu0 0.0
      %615 = vmatpush.msra.mxu0 0.0
      %616 = vmatpush.msra.mxu0 0.0
      %617 = vmatpush.msra.mxu0 0.0
      %618 = vmatpush.msra.mxu0 0.0
      %619 = vmatpush.msra.mxu0 0.0
      %620 = vmatpush.msra.mxu0 0.0
      %621 = vmatpush.msra.mxu0 0.0
      %622 = vmatpush.msra.mxu0 0.0
      %623 = vmatpush.msra.mxu0 0.0
      %624 = vmatpush.msra.mxu0 0.0
      %625 = vmatpush.msra.mxu0 0.0
      %626 = vmatpush.msra.mxu0 0.0
      %627 = vmatpush.msra.mxu0 0.0
      %628 = vmatpush.msra.mxu0 0.0
      %629 = vmatpush.msra.mxu0 %v592
      %630 = vmatmul.f32.gmra.mxu0 %v588
      %v631 = vpop.f32.mrf.mxu0
      %v632 = vadd.f32 0.0, %v631
      %633 = vdwg.mxu0
      %v634 = vmul.f32 %v612, %v441
      %v635 = vmul.f32 %v632, %v442
      %v636 = vadd.f32 %v572, %v634
      %v637 = vadd.f32 %v573, %v635
      %v638 = vld [vmem:[#allocation2 + $0x4] sm:$0xff]
      %s639 = scalar_lea.vmem %s2, 16
      %v640 = vld [vmem:[%s639] sm:$0xf]
      %642 = vst [vmem:[#allocation1] ss:$2 sm:$0xff] %v638
      %v643 = vld.sshfl [vmem:[#allocation1] sm:$0xff pattern:$0x75316420]
      %v644 = vld.sshfl [vmem:[#allocation1 + $0x8] sm:$0xff pattern:$0x75316420]
      %645 = vrot.lane.b32.xlu0 %v643, 96
      %v646 = vpop.permute.xlu0 %645
      %647 = vrot.lane.b32.xlu0 %v644, 96
      %v648 = vpop.permute.xlu0 %647
      %vm649 = vcmask 785408
      %v650 = vsel %vm649, %v646, %v648
      %v652 = vsel %vm391, %v640, 0
      %v654 = vsel %vm395, %v650, 0
      %v656 = vsel %vm395, %v648, 0
      %658 = vmatpush.msra.mxu0 0.0
      %659 = vmatpush.msra.mxu0 0.0
      %660 = vmatpush.msra.mxu0 0.0
      %661 = vmatpush.msra.mxu0 0.0
      %662 = vmatpush.msra.mxu0 0.0
      %663 = vmatpush.msra.mxu0 0.0
      %664 = vmatpush.msra.mxu0 0.0
      %665 = vmatpush.msra.mxu0 0.0
      %666 = vmatpush.msra.mxu0 0.0
      %667 = vmatpush.msra.mxu0 0.0
      %668 = vmatpush.msra.mxu0 0.0
      %669 = vmatpush.msra.mxu0 0.0
      %670 = vmatpush.msra.mxu0 0.0
      %671 = vmatpush.msra.mxu0 0.0
      %672 = vmatpush.msra.mxu0 0.0
      %673 = vmatpush.msra.mxu0 %v654
      %674 = vmatmul.f32.gmra.mxu0 %v652
      %v675 = vpop.f32.mrf.mxu0
      %v676 = vadd.f32 0.0, %v675
      %677 = vdwg.mxu0
      %678 = vmatpush.msra.mxu0 0.0
      %679 = vmatpush.msra.mxu0 0.0
      %680 = vmatpush.msra.mxu0 0.0
      %681 = vmatpush.msra.mxu0 0.0
      %682 = vmatpush.msra.mxu0 0.0
      %683 = vmatpush.msra.mxu0 0.0
      %684 = vmatpush.msra.mxu0 0.0
      %685 = vmatpush.msra.mxu0 0.0
      %686 = vmatpush.msra.mxu0 0.0
      %687 = vmatpush.msra.mxu0 0.0
      %688 = vmatpush.msra.mxu0 0.0
      %689 = vmatpush.msra.mxu0 0.0
      %690 = vmatpush.msra.mxu0 0.0
      %691 = vmatpush.msra.mxu0 0.0
      %692 = vmatpush.msra.mxu0 0.0
      %693 = vmatpush.msra.mxu0 %v656
      %694 = vmatmul.f32.gmra.mxu0 %v652
      %v695 = vpop.f32.mrf.mxu0
      %v696 = vadd.f32 0.0, %v695
      %697 = vdwg.mxu0
      %v698 = vadd.f32 %v636, %v676
      %v699 = vadd.f32 %v637, %v696
      %v700 = vld [vmem:[#allocation2 + $0x4] sm:$0xff]
      %s701 = scalar_lea.vmem %s2, 20
      %v702 = vld [vmem:[%s701] sm:$0xf]
      %704 = vst [vmem:[#allocation1] ss:$2 sm:$0xff] %v700
      %v705 = vld.sshfl [vmem:[#allocation1] sm:$0xff pattern:$0x75316420]
      %v706 = vld.sshfl [vmem:[#allocation1 + $0x8] sm:$0xff pattern:$0x75316420]
      %707 = vrot.lane.b32.xlu0 %v705, 94
      %v708 = vpop.permute.xlu0 %707
      %709 = vrot.lane.b32.xlu0 %v706, 94
      %v710 = vpop.permute.xlu0 %709
      %vm711 = vcmask 769024
      %v712 = vsel %vm711, %v708, %v710
      %v714 = vsel %vm391, %v702, 0
      %v716 = vsel %vm395, %v712, 0
      %v718 = vsel %vm395, %v710, 0
      %720 = vmatpush.msra.mxu0 0.0
      %721 = vmatpush.msra.mxu0 0.0
      %722 = vmatpush.msra.mxu0 0.0
      %723 = vmatpush.msra.mxu0 0.0
      %724 = vmatpush.msra.mxu0 0.0
      %725 = vmatpush.msra.mxu0 0.0
      %726 = vmatpush.msra.mxu0 0.0
      %727 = vmatpush.msra.mxu0 0.0
      %728 = vmatpush.msra.mxu0 0.0
      %729 = vmatpush.msra.mxu0 0.0
      %730 = vmatpush.msra.mxu0 0.0
      %731 = vmatpush.msra.mxu0 0.0
      %732 = vmatpush.msra.mxu0 0.0
      %733 = vmatpush.msra.mxu0 0.0
      %734 = vmatpush.msra.mxu0 0.0
      %735 = vmatpush.msra.mxu0 %v716
      %736 = vmatmul.f32.gmra.mxu0 %v714
      %v737 = vpop.f32.mrf.mxu0
      %v738 = vadd.f32 0.0, %v737
      %739 = vdwg.mxu0
      %740 = vmatpush.msra.mxu0 0.0
      %741 = vmatpush.msra.mxu0 0.0
      %742 = vmatpush.msra.mxu0 0.0
      %743 = vmatpush.msra.mxu0 0.0
      %744 = vmatpush.msra.mxu0 0.0
      %745 = vmatpush.msra.mxu0 0.0
      %746 = vmatpush.msra.mxu0 0.0
      %747 = vmatpush.msra.mxu0 0.0
      %748 = vmatpush.msra.mxu0 0.0
      %749 = vmatpush.msra.mxu0 0.0
      %750 = vmatpush.msra.mxu0 0.0
      %751 = vmatpush.msra.mxu0 0.0
      %752 = vmatpush.msra.mxu0 0.0
      %753 = vmatpush.msra.mxu0 0.0
      %754 = vmatpush.msra.mxu0 0.0
      %755 = vmatpush.msra.mxu0 %v718
      %756 = vmatmul.f32.gmra.mxu0 %v714
      %v757 = vpop.f32.mrf.mxu0
      %v758 = vadd.f32 0.0, %v757
      %759 = vdwg.mxu0
      %v760 = vmul.f32 %v738, %v566
      %v761 = vmul.f32 %v758, %v567
      %v762 = vadd.f32 %v698, %v760
      %v763 = vadd.f32 %v699, %v761
      %v764 = vld [vmem:[#allocation2 + $0x4] sm:$0xff]
      %s765 = scalar_lea.vmem %s2, 24
      %v766 = vld [vmem:[%s765] sm:$0xf]
      %768 = vst [vmem:[#allocation1] ss:$2 sm:$0xff] %v764
      %v769 = vld.sshfl [vmem:[#allocation1] sm:$0xff pattern:$0x75316420]
      %v770 = vld.sshfl [vmem:[#allocation1 + $0x8] sm:$0xff pattern:$0x75316420]
      %771 = vrot.lane.b32.xlu0 %v769, 66
      %v772 = vpop.permute.xlu0 %771
      %773 = vrot.lane.b32.xlu0 %v770, 66
      %v774 = vpop.permute.xlu0 %773
      %vm775 = vcmask 539648
      %v776 = vsel %vm775, %v772, %v774
      %v778 = vsel %vm391, %v766, 0
      %v780 = vsel %vm395, %v776, 0
      %v782 = vsel %vm395, %v774, 0
      %784 = vmatpush.msra.mxu0 0.0
      %785 = vmatpush.msra.mxu0 0.0
      %786 = vmatpush.msra.mxu0 0.0
      %787 = vmatpush.msra.mxu0 0.0
      %788 = vmatpush.msra.mxu0 0.0
      %789 = vmatpush.msra.mxu0 0.0
      %790 = vmatpush.msra.mxu0 0.0
      %791 = vmatpush.msra.mxu0 0.0
      %792 = vmatpush.msra.mxu0 0.0
      %793 = vmatpush.msra.mxu0 0.0
      %794 = vmatpush.msra.mxu0 0.0
      %795 = vmatpush.msra.mxu0 0.0
      %796 = vmatpush.msra.mxu0 0.0
      %797 = vmatpush.msra.mxu0 0.0
      %798 = vmatpush.msra.mxu0 0.0
      %799 = vmatpush.msra.mxu0 %v780
      %800 = vmatmul.f32.gmra.mxu0 %v778
      %v801 = vpop.f32.mrf.mxu0
      %v802 = vadd.f32 0.0, %v801
      %803 = vdwg.mxu0
      %804 = vmatpush.msra.mxu0 0.0
      %805 = vmatpush.msra.mxu0 0.0
      %806 = vmatpush.msra.mxu0 0.0
      %807 = vmatpush.msra.mxu0 0.0
      %808 = vmatpush.msra.mxu0 0.0
      %809 = vmatpush.msra.mxu0 0.0
      %810 = vmatpush.msra.mxu0 0.0
      %811 = vmatpush.msra.mxu0 0.0
      %812 = vmatpush.msra.mxu0 0.0
      %813 = vmatpush.msra.mxu0 0.0
      %814 = vmatpush.msra.mxu0 0.0
      %815 = vmatpush.msra.mxu0 0.0
      %816 = vmatpush.msra.mxu0 0.0
      %817 = vmatpush.msra.mxu0 0.0
      %818 = vmatpush.msra.mxu0 0.0
      %819 = vmatpush.msra.mxu0 %v782
      %820 = vmatmul.f32.gmra.mxu0 %v778
      %v821 = vpop.f32.mrf.mxu0
      %v822 = vadd.f32 0.0, %v821
      %823 = vdwg.mxu0
      %v824 = vmul.f32 %v802, %v441
      %v825 = vmul.f32 %v822, %v442
      %v826 = vadd.f32 %v762, %v824
      %v827 = vadd.f32 %v763, %v825
      %v828 = vld [vmem:[#allocation2 + $0x4] sm:$0xff]
      %s829 = scalar_lea.vmem %s2, 28
      %v830 = vld [vmem:[%s829] sm:$0xf]
      %832 = vst [vmem:[#allocation1] ss:$2 sm:$0xff] %v828
      %v833 = vld.sshfl [vmem:[#allocation1] sm:$0xff pattern:$0x75316420]
      %v834 = vld.sshfl [vmem:[#allocation1 + $0x8] sm:$0xff pattern:$0x75316420]
      %835 = vrot.lane.b32.xlu0 %v833, 64
      %v836 = vpop.permute.xlu0 %835
      %837 = vrot.lane.b32.xlu0 %v834, 64
      %v838 = vpop.permute.xlu0 %837
      %vm839 = vcmask 523264
      %v840 = vsel %vm839, %v836, %v838
      %v842 = vsel %vm391, %v830, 0
      %v844 = vsel %vm395, %v840, 0
      %v846 = vsel %vm395, %v838, 0
      %848 = vmatpush.msra.mxu0 0.0
      %849 = vmatpush.msra.mxu0 0.0
      %850 = vmatpush.msra.mxu0 0.0
      %851 = vmatpush.msra.mxu0 0.0
      %852 = vmatpush.msra.mxu0 0.0
      %853 = vmatpush.msra.mxu0 0.0
      %854 = vmatpush.msra.mxu0 0.0
      %855 = vmatpush.msra.mxu0 0.0
      %856 = vmatpush.msra.mxu0 0.0
      %857 = vmatpush.msra.mxu0 0.0
      %858 = vmatpush.msra.mxu0 0.0
      %859 = vmatpush.msra.mxu0 0.0
      %860 = vmatpush.msra.mxu0 0.0
      %861 = vmatpush.msra.mxu0 0.0
      %862 = vmatpush.msra.mxu0 0.0
      %863 = vmatpush.msra.mxu0 %v844
      %864 = vmatmul.f32.gmra.mxu0 %v842
      %v865 = vpop.f32.mrf.mxu0
      %v866 = vadd.f32 0.0, %v865
      %867 = vdwg.mxu0
      %868 = vmatpush.msra.mxu0 0.0
      %869 = vmatpush.msra.mxu0 0.0
      %870 = vmatpush.msra.mxu0 0.0
      %871 = vmatpush.msra.mxu0 0.0
      %872 = vmatpush.msra.mxu0 0.0
      %873 = vmatpush.msra.mxu0 0.0
      %874 = vmatpush.msra.mxu0 0.0
      %875 = vmatpush.msra.mxu0 0.0
      %876 = vmatpush.msra.mxu0 0.0
      %877 = vmatpush.msra.mxu0 0.0
      %878 = vmatpush.msra.mxu0 0.0
      %879 = vmatpush.msra.mxu0 0.0
      %880 = vmatpush.msra.mxu0 0.0
      %881 = vmatpush.msra.mxu0 0.0
      %882 = vmatpush.msra.mxu0 0.0
      %883 = vmatpush.msra.mxu0 %v846
      %884 = vmatmul.f32.gmra.mxu0 %v842
      %v885 = vpop.f32.mrf.mxu0
      %v886 = vadd.f32 0.0, %v885
      %887 = vdwg.mxu0
      %v888 = vadd.f32 %v826, %v866
      %v889 = vadd.f32 %v827, %v886
      %v890 = vld [vmem:[#allocation2 + $0x4] sm:$0xff]
      %s891 = scalar_lea.vmem %s2, 32
      %v892 = vld [vmem:[%s891] sm:$0xf]
      %894 = vst [vmem:[#allocation1] ss:$2 sm:$0xff] %v890
      %v895 = vld.sshfl [vmem:[#allocation1] sm:$0xff pattern:$0x75316420]
      %v896 = vld.sshfl [vmem:[#allocation1 + $0x8] sm:$0xff pattern:$0x75316420]
      %897 = vrot.lane.b32.xlu0 %v895, 62
      %v898 = vpop.permute.xlu0 %897
      %899 = vrot.lane.b32.xlu0 %v896, 62
      %v900 = vpop.permute.xlu0 %899
      %vm901 = vcmask 506880
      %v902 = vsel %vm901, %v898, %v900
      %v904 = vsel %vm391, %v892, 0
      %v906 = vsel %vm395, %v902, 0
      %v908 = vsel %vm395, %v900, 0
      %910 = vmatpush.msra.mxu0 0.0
      %911 = vmatpush.msra.mxu0 0.0
      %912 = vmatpush.msra.mxu0 0.0
      %913 = vmatpush.msra.mxu0 0.0
      %914 = vmatpush.msra.mxu0 0.0
      %915 = vmatpush.msra.mxu0 0.0
      %916 = vmatpush.msra.mxu0 0.0
      %917 = vmatpush.msra.mxu0 0.0
      %918 = vmatpush.msra.mxu0 0.0
      %919 = vmatpush.msra.mxu0 0.0
      %920 = vmatpush.msra.mxu0 0.0
      %921 = vmatpush.msra.mxu0 0.0
      %922 = vmatpush.msra.mxu0 0.0
      %923 = vmatpush.msra.mxu0 0.0
      %924 = vmatpush.msra.mxu0 0.0
      %925 = vmatpush.msra.mxu0 %v906
      %926 = vmatmul.f32.gmra.mxu0 %v904
      %v927 = vpop.f32.mrf.mxu0
      %v928 = vadd.f32 0.0, %v927
      %929 = vdwg.mxu0
      %930 = vmatpush.msra.mxu0 0.0
      %931 = vmatpush.msra.mxu0 0.0
      %932 = vmatpush.msra.mxu0 0.0
      %933 = vmatpush.msra.mxu0 0.0
      %934 = vmatpush.msra.mxu0 0.0
      %935 = vmatpush.msra.mxu0 0.0
      %936 = vmatpush.msra.mxu0 0.0
      %937 = vmatpush.msra.mxu0 0.0
      %938 = vmatpush.msra.mxu0 0.0
      %939 = vmatpush.msra.mxu0 0.0
      %940 = vmatpush.msra.mxu0 0.0
      %941 = vmatpush.msra.mxu0 0.0
      %942 = vmatpush.msra.mxu0 0.0
      %943 = vmatpush.msra.mxu0 0.0
      %944 = vmatpush.msra.mxu0 0.0
      %945 = vmatpush.msra.mxu0 %v908
      %946 = vmatmul.f32.gmra.mxu0 %v904
      %v947 = vpop.f32.mrf.mxu0
      %v948 = vadd.f32 0.0, %v947
      %949 = vdwg.mxu0
      %v950 = vmul.f32 %v928, %v566
      %v951 = vmul.f32 %v948, %v567
      %v952 = vadd.f32 %v888, %v950
      %v953 = vadd.f32 %v889, %v951
      %955 = vset.pattern.permute.xlu0 0
      %956 = vperm.xlu0 %955, %v364
      %v957 = vpop.permute.xlu0 %956
      %v959 = vadd.f32 %v952, %v957
      %v960 = vadd.f32 %v953, %v957
      %v961 = vmax.f32 %v959, 0.0
      %v962 = vmax.f32 %v960, 0.0
      %963 = vst [vmem:[#allocation3] sm:$0xf] 0.0
      %v966 = vrot.slane %v962, 4
      %v967 = vsel %vm395, %v961, %v966
      %vm969 = vcmask 261124
      %vm970 = vmor %vm969, %vm395
      %971 = vst.msk [vmem:[#allocation3 + $0x4] sm:$0xff] %vm970, %v967
      %vm972 = vcmask 1043712
      %vm973 = vmor %vm969, %vm972
      %974 = vst.msk [vmem:[#allocation3 + $0x8] sm:$0xff] %vm973, 0.0
      %p975 = scmp.eq.s32.totalorder %s23, 0
      // Predicated region
      $region49: #{dblock_com1_forward.1} parent=47 // pred_check
        %p976 = pneg %p975
      $region50: #{dblock_com1_forward.1} parent=47 // pred_check_branch
        %978 = sbr.rel (%p976) target = $region52
      $region51: #{dblock_com1_forward.1} parent=47 // pred_region
        %vm979 = vcmask 125952
        %980 = vst.msk [vmem:[#allocation3 + $0x4] sm:$0xf] %vm979, 0.0
      $region52: #{dblock_com1_forward.1} parent=47 // pred_fallthru
        _
      %p981 = scmp.eq.s32.totalorder %s23, 1
      // Predicated region
      $region53: #{dblock_com1_forward.1} parent=47 // pred_check
        %p982 = pneg %p981
      $region54: #{dblock_com1_forward.1} parent=47 // pred_check_branch
        %984 = sbr.rel (%p982) target = $region56
      $region55: #{dblock_com1_forward.1} parent=47 // pred_region
        %vm985 = vcmask 257152
        %986 = vst.msk [vmem:[#allocation3 + $0x8] sm:$0xf] %vm985, 0.0
      $region56: #{dblock_com1_forward.1} parent=47 // pred_fallthru
        _
      %v987 = vld [vmem:[#allocation3] sm:$0xff]
      %v988 = vld [vmem:[%s3] sm:$0xf]
      %990 = vst [vmem:[#allocation1] ss:$2 sm:$0xff] %v987
      %v991 = vld.sshfl [vmem:[#allocation1] sm:$0xff pattern:$0x75316420]
      %v992 = vld.sshfl [vmem:[#allocation1 + $0x8] sm:$0xff pattern:$0x75316420]
      %993 = vrot.lane.b32.xlu0 %v991, 1
      %v994 = vpop.permute.xlu0 %993
      %995 = vrot.lane.b32.xlu0 %v992, 1
      %v996 = vpop.permute.xlu0 %995
      %vm997 = vcmask 7168
      %v998 = vsel %vm997, %v994, %v996
      %v1000 = vsel %vm391, %v988, 0
      %v1002 = vsel %vm395, %v998, 0
      %1004 = vmatpush.msra.mxu0 0.0
      %1005 = vmatpush.msra.mxu0 0.0
      %1006 = vmatpush.msra.mxu0 0.0
      %1007 = vmatpush.msra.mxu0 0.0
      %1008 = vmatpush.msra.mxu0 0.0
      %1009 = vmatpush.msra.mxu0 0.0
      %1010 = vmatpush.msra.mxu0 0.0
      %1011 = vmatpush.msra.mxu0 0.0
      %1012 = vmatpush.msra.mxu0 0.0
      %1013 = vmatpush.msra.mxu0 0.0
      %1014 = vmatpush.msra.mxu0 0.0
      %1015 = vmatpush.msra.mxu0 0.0
      %1016 = vmatpush.msra.mxu0 0.0
      %1017 = vmatpush.msra.mxu0 0.0
      %1018 = vmatpush.msra.mxu0 0.0
      %1019 = vmatpush.msra.mxu0 %v1002
      %1020 = vmatmul.f32.gmra.mxu0 %v1000
      %v1021 = vpop.f32.mrf.mxu0
      %v1022 = vadd.f32 0.0, %v1021
      %1023 = vdwg.mxu0
      %v1024 = vperm.slane %v369, 0
      %v1025 = vmul.f32 %v1022, %v1024
      %v1026 = vadd.f32 %v1025, 0.0
      %v1027 = vld [vmem:[#allocation3 + $0x4] sm:$0xf]
      %s1028 = scalar_lea.vmem %s3, 4
      %v1029 = vld [vmem:[%s1028] sm:$0xf]
      %v1031 = vsel %vm391, %v1029, 0
      %v1034 = vsel %vm395, %v1027, 0
      %1036 = vmatpush.msra.mxu0 0.0
      %1037 = vmatpush.msra.mxu0 0.0
      %1038 = vmatpush.msra.mxu0 0.0
      %1039 = vmatpush.msra.mxu0 0.0
      %1040 = vmatpush.msra.mxu0 0.0
      %1041 = vmatpush.msra.mxu0 0.0
      %1042 = vmatpush.msra.mxu0 0.0
      %1043 = vmatpush.msra.mxu0 0.0
      %1044 = vmatpush.msra.mxu0 0.0
      %1045 = vmatpush.msra.mxu0 0.0
      %1046 = vmatpush.msra.mxu0 0.0
      %1047 = vmatpush.msra.mxu0 0.0
      %1048 = vmatpush.msra.mxu0 0.0
      %1049 = vmatpush.msra.mxu0 0.0
      %1050 = vmatpush.msra.mxu0 0.0
      %1051 = vmatpush.msra.mxu0 %v1034
      %1052 = vmatmul.f32.gmra.mxu0 %v1031
      %v1053 = vpop.f32.mrf.mxu0
      %v1054 = vadd.f32 0.0, %v1053
      %1055 = vdwg.mxu0
      %v1056 = vadd.f32 %v1026, %v1054
      %v1057 = vld [vmem:[#allocation3 + $0x4] sm:$0xff]
      %s1058 = scalar_lea.vmem %s3, 8
      %v1059 = vld [vmem:[%s1058] sm:$0xf]
      %1061 = vst [vmem:[#allocation1] ss:$2 sm:$0xff] %v1057
      %v1062 = vld.sshfl [vmem:[#allocation1] sm:$0xff pattern:$0x75316420]
      %v1063 = vld.sshfl [vmem:[#allocation1 + $0x8] sm:$0xff pattern:$0x75316420]
      %1064 = vrot.lane.b32.xlu0 %v1062, 127
      %v1065 = vpop.permute.xlu0 %1064
      %1066 = vrot.lane.b32.xlu0 %v1063, 127
      %v1067 = vpop.permute.xlu0 %1066
      %vm1068 = vcmask 1039360
      %v1069 = vsel %vm1068, %v1065, %v1067
      %v1071 = vsel %vm391, %v1059, 0
      %v1073 = vsel %vm395, %v1069, 0
      %1075 = vmatpush.msra.mxu0 0.0
      %1076 = vmatpush.msra.mxu0 0.0
      %1077 = vmatpush.msra.mxu0 0.0
      %1078 = vmatpush.msra.mxu0 0.0
      %1079 = vmatpush.msra.mxu0 0.0
      %1080 = vmatpush.msra.mxu0 0.0
      %1081 = vmatpush.msra.mxu0 0.0
      %1082 = vmatpush.msra.mxu0 0.0
      %1083 = vmatpush.msra.mxu0 0.0
      %1084 = vmatpush.msra.mxu0 0.0
      %1085 = vmatpush.msra.mxu0 0.0
      %1086 = vmatpush.msra.mxu0 0.0
      %1087 = vmatpush.msra.mxu0 0.0
      %1088 = vmatpush.msra.mxu0 0.0
      %1089 = vmatpush.msra.mxu0 0.0
      %1090 = vmatpush.msra.mxu0 %v1073
      %1091 = vmatmul.f32.gmra.mxu0 %v1071
      %v1092 = vpop.f32.mrf.mxu0
      %v1093 = vadd.f32 0.0, %v1092
      %1094 = vdwg.mxu0
      %v1095 = vperm.slane %v370, 0
      %v1096 = vmul.f32 %v1093, %v1095
      %v1097 = vadd.f32 %v1056, %v1096
      %v1098 = vld [vmem:[#allocation3 + $0x4] sm:$0xff]
      %s1099 = scalar_lea.vmem %s3, 12
      %v1100 = vld [vmem:[%s1099] sm:$0xf]
      %1102 = vst [vmem:[#allocation1] ss:$2 sm:$0xff] %v1098
      %v1103 = vld.sshfl [vmem:[#allocation1] sm:$0xff pattern:$0x75316420]
      %v1104 = vld.sshfl [vmem:[#allocation1 + $0x8] sm:$0xff pattern:$0x75316420]
      %1105 = vrot.lane.b32.xlu0 %v1103, 113
      %v1106 = vpop.permute.xlu0 %1105
      %1107 = vrot.lane.b32.xlu0 %v1104, 113
      %v1108 = vpop.permute.xlu0 %1107
      %vm1109 = vcmask 924672
      %v1110 = vsel %vm1109, %v1106, %v1108
      %v1112 = vsel %vm391, %v1100, 0
      %v1114 = vsel %vm395, %v1110, 0
      %1116 = vmatpush.msra.mxu0 0.0
      %1117 = vmatpush.msra.mxu0 0.0
      %1118 = vmatpush.msra.mxu0 0.0
      %1119 = vmatpush.msra.mxu0 0.0
      %1120 = vmatpush.msra.mxu0 0.0
      %1121 = vmatpush.msra.mxu0 0.0
      %1122 = vmatpush.msra.mxu0 0.0
      %1123 = vmatpush.msra.mxu0 0.0
      %1124 = vmatpush.msra.mxu0 0.0
      %1125 = vmatpush.msra.mxu0 0.0
      %1126 = vmatpush.msra.mxu0 0.0
      %1127 = vmatpush.msra.mxu0 0.0
      %1128 = vmatpush.msra.mxu0 0.0
      %1129 = vmatpush.msra.mxu0 0.0
      %1130 = vmatpush.msra.mxu0 0.0
      %1131 = vmatpush.msra.mxu0 %v1114
      %1132 = vmatmul.f32.gmra.mxu0 %v1112
      %v1133 = vpop.f32.mrf.mxu0
      %v1134 = vadd.f32 0.0, %v1133
      %1135 = vdwg.mxu0
      %v1136 = vmul.f32 %v1134, %v1024
      %v1137 = vadd.f32 %v1097, %v1136
      %v1138 = vld [vmem:[#allocation3 + $0x4] sm:$0xff]
      %s1139 = scalar_lea.vmem %s3, 16
      %v1140 = vld [vmem:[%s1139] sm:$0xf]
      %1142 = vst [vmem:[#allocation1] ss:$2 sm:$0xff] %v1138
      %v1143 = vld.sshfl [vmem:[#allocation1] sm:$0xff pattern:$0x75316420]
      %v1144 = vld.sshfl [vmem:[#allocation1 + $0x8] sm:$0xff pattern:$0x75316420]
      %1145 = vrot.lane.b32.xlu0 %v1143, 112
      %v1146 = vpop.permute.xlu0 %1145
      %1147 = vrot.lane.b32.xlu0 %v1144, 112
      %v1148 = vpop.permute.xlu0 %1147
      %vm1149 = vcmask 916480
      %v1150 = vsel %vm1149, %v1146, %v1148
      %v1152 = vsel %vm391, %v1140, 0
      %v1154 = vsel %vm395, %v1150, 0
      %1156 = vmatpush.msra.mxu0 0.0
      %1157 = vmatpush.msra.mxu0 0.0
      %1158 = vmatpush.msra.mxu0 0.0
      %1159 = vmatpush.msra.mxu0 0.0
      %1160 = vmatpush.msra.mxu0 0.0
      %1161 = vmatpush.msra.mxu0 0.0
      %1162 = vmatpush.msra.mxu0 0.0
      %1163 = vmatpush.msra.mxu0 0.0
      %1164 = vmatpush.msra.mxu0 0.0
      %1165 = vmatpush.msra.mxu0 0.0
      %1166 = vmatpush.msra.mxu0 0.0
      %1167 = vmatpush.msra.mxu0 0.0
      %1168 = vmatpush.msra.mxu0 0.0
      %1169 = vmatpush.msra.mxu0 0.0
      %1170 = vmatpush.msra.mxu0 0.0
      %1171 = vmatpush.msra.mxu0 %v1154
      %1172 = vmatmul.f32.gmra.mxu0 %v1152
      %v1173 = vpop.f32.mrf.mxu0
      %v1174 = vadd.f32 0.0, %v1173
      %1175 = vdwg.mxu0
      %v1176 = vadd.f32 %v1137, %v1174
      %v1177 = vld [vmem:[#allocation3 + $0x4] sm:$0xff]
      %s1178 = scalar_lea.vmem %s3, 20
      %v1179 = vld [vmem:[%s1178] sm:$0xf]
      %1181 = vst [vmem:[#allocation1] ss:$2 sm:$0xff] %v1177
      %v1182 = vld.sshfl [vmem:[#allocation1] sm:$0xff pattern:$0x75316420]
      %v1183 = vld.sshfl [vmem:[#allocation1 + $0x8] sm:$0xff pattern:$0x75316420]
      %1184 = vrot.lane.b32.xlu0 %v1182, 111
      %v1185 = vpop.permute.xlu0 %1184
      %1186 = vrot.lane.b32.xlu0 %v1183, 111
      %v1187 = vpop.permute.xlu0 %1186
      %vm1188 = vcmask 908288
      %v1189 = vsel %vm1188, %v1185, %v1187
      %v1191 = vsel %vm391, %v1179, 0
      %v1193 = vsel %vm395, %v1189, 0
      %1195 = vmatpush.msra.mxu0 0.0
      %1196 = vmatpush.msra.mxu0 0.0
      %1197 = vmatpush.msra.mxu0 0.0
      %1198 = vmatpush.msra.mxu0 0.0
      %1199 = vmatpush.msra.mxu0 0.0
      %1200 = vmatpush.msra.mxu0 0.0
      %1201 = vmatpush.msra.mxu0 0.0
      %1202 = vmatpush.msra.mxu0 0.0
      %1203 = vmatpush.msra.mxu0 0.0
      %1204 = vmatpush.msra.mxu0 0.0
      %1205 = vmatpush.msra.mxu0 0.0
      %1206 = vmatpush.msra.mxu0 0.0
      %1207 = vmatpush.msra.mxu0 0.0
      %1208 = vmatpush.msra.mxu0 0.0
      %1209 = vmatpush.msra.mxu0 0.0
      %1210 = vmatpush.msra.mxu0 %v1193
      %1211 = vmatmul.f32.gmra.mxu0 %v1191
      %v1212 = vpop.f32.mrf.mxu0
      %v1213 = vadd.f32 0.0, %v1212
      %1214 = vdwg.mxu0
      %v1215 = vmul.f32 %v1213, %v1095
      %v1216 = vadd.f32 %v1176, %v1215
      %v1217 = vld [vmem:[#allocation3 + $0x4] sm:$0xff]
      %s1218 = scalar_lea.vmem %s3, 24
      %v1219 = vld [vmem:[%s1218] sm:$0xf]
      %1221 = vst [vmem:[#allocation1] ss:$2 sm:$0xff] %v1217
      %v1222 = vld.sshfl [vmem:[#allocation1] sm:$0xff pattern:$0x75316420]
      %v1223 = vld.sshfl [vmem:[#allocation1 + $0x8] sm:$0xff pattern:$0x75316420]
      %1224 = vrot.lane.b32.xlu0 %v1222, 97
      %v1225 = vpop.permute.xlu0 %1224
      %1226 = vrot.lane.b32.xlu0 %v1223, 97
      %v1227 = vpop.permute.xlu0 %1226
      %vm1228 = vcmask 793600
      %v1229 = vsel %vm1228, %v1225, %v1227
      %v1231 = vsel %vm391, %v1219, 0
      %v1233 = vsel %vm395, %v1229, 0
      %1235 = vmatpush.msra.mxu0 0.0
      %1236 = vmatpush.msra.mxu0 0.0
      %1237 = vmatpush.msra.mxu0 0.0
      %1238 = vmatpush.msra.mxu0 0.0
      %1239 = vmatpush.msra.mxu0 0.0
      %1240 = vmatpush.msra.mxu0 0.0
      %1241 = vmatpush.msra.mxu0 0.0
      %1242 = vmatpush.msra.mxu0 0.0
      %1243 = vmatpush.msra.mxu0 0.0
      %1244 = vmatpush.msra.mxu0 0.0
      %1245 = vmatpush.msra.mxu0 0.0
      %1246 = vmatpush.msra.mxu0 0.0
      %1247 = vmatpush.msra.mxu0 0.0
      %1248 = vmatpush.msra.mxu0 0.0
      %1249 = vmatpush.msra.mxu0 0.0
      %1250 = vmatpush.msra.mxu0 %v1233
      %1251 = vmatmul.f32.gmra.mxu0 %v1231
      %v1252 = vpop.f32.mrf.mxu0
      %v1253 = vadd.f32 0.0, %v1252
      %1254 = vdwg.mxu0
      %v1255 = vmul.f32 %v1253, %v1024
      %v1256 = vadd.f32 %v1216, %v1255
      %v1257 = vld [vmem:[#allocation3 + $0x4] sm:$0xff]
      %s1258 = scalar_lea.vmem %s3, 28
      %v1259 = vld [vmem:[%s1258] sm:$0xf]
      %1261 = vst [vmem:[#allocation1] ss:$2 sm:$0xff] %v1257
      %v1262 = vld.sshfl [vmem:[#allocation1] sm:$0xff pattern:$0x75316420]
      %v1263 = vld.sshfl [vmem:[#allocation1 + $0x8] sm:$0xff pattern:$0x75316420]
      %1264 = vrot.lane.b32.xlu0 %v1262, 96
      %v1265 = vpop.permute.xlu0 %1264
      %1266 = vrot.lane.b32.xlu0 %v1263, 96
      %v1267 = vpop.permute.xlu0 %1266
      %v1268 = vsel %vm649, %v1265, %v1267
      %v1270 = vsel %vm391, %v1259, 0
      %v1272 = vsel %vm395, %v1268, 0
      %1274 = vmatpush.msra.mxu0 0.0
      %1275 = vmatpush.msra.mxu0 0.0
      %1276 = vmatpush.msra.mxu0 0.0
      %1277 = vmatpush.msra.mxu0 0.0
      %1278 = vmatpush.msra.mxu0 0.0
      %1279 = vmatpush.msra.mxu0 0.0
      %1280 = vmatpush.msra.mxu0 0.0
      %1281 = vmatpush.msra.mxu0 0.0
      %1282 = vmatpush.msra.mxu0 0.0
      %1283 = vmatpush.msra.mxu0 0.0
      %1284 = vmatpush.msra.mxu0 0.0
      %1285 = vmatpush.msra.mxu0 0.0
      %1286 = vmatpush.msra.mxu0 0.0
      %1287 = vmatpush.msra.mxu0 0.0
      %1288 = vmatpush.msra.mxu0 0.0
      %1289 = vmatpush.msra.mxu0 %v1272
      %1290 = vmatmul.f32.gmra.mxu0 %v1270
      %v1291 = vpop.f32.mrf.mxu0
      %v1292 = vadd.f32 0.0, %v1291
      %1293 = vdwg.mxu0
      %v1294 = vadd.f32 %v1256, %v1292
      %v1295 = vld [vmem:[#allocation3 + $0x4] sm:$0xff]
      %s1296 = scalar_lea.vmem %s3, 32
      %v1297 = vld [vmem:[%s1296] sm:$0xf]
      %1299 = vst [vmem:[#allocation1] ss:$2 sm:$0xff] %v1295
      %v1300 = vld.sshfl [vmem:[#allocation1] sm:$0xff pattern:$0x75316420]
      %v1301 = vld.sshfl [vmem:[#allocation1 + $0x8] sm:$0xff pattern:$0x75316420]
      %1302 = vrot.lane.b32.xlu0 %v1300, 95
      %v1303 = vpop.permute.xlu0 %1302
      %1304 = vrot.lane.b32.xlu0 %v1301, 95
      %v1305 = vpop.permute.xlu0 %1304
      %vm1306 = vcmask 777216
      %v1307 = vsel %vm1306, %v1303, %v1305
      %v1309 = vsel %vm391, %v1297, 0
      %v1311 = vsel %vm395, %v1307, 0
      %1313 = vmatpush.msra.mxu0 0.0
      %1314 = vmatpush.msra.mxu0 0.0
      %1315 = vmatpush.msra.mxu0 0.0
      %1316 = vmatpush.msra.mxu0 0.0
      %1317 = vmatpush.msra.mxu0 0.0
      %1318 = vmatpush.msra.mxu0 0.0
      %1319 = vmatpush.msra.mxu0 0.0
      %1320 = vmatpush.msra.mxu0 0.0
      %1321 = vmatpush.msra.mxu0 0.0
      %1322 = vmatpush.msra.mxu0 0.0
      %1323 = vmatpush.msra.mxu0 0.0
      %1324 = vmatpush.msra.mxu0 0.0
      %1325 = vmatpush.msra.mxu0 0.0
      %1326 = vmatpush.msra.mxu0 0.0
      %1327 = vmatpush.msra.mxu0 0.0
      %1328 = vmatpush.msra.mxu0 %v1311
      %1329 = vmatmul.f32.gmra.mxu0 %v1309
      %v1330 = vpop.f32.mrf.mxu0
      %v1331 = vadd.f32 0.0, %v1330
      %1332 = vdwg.mxu0
      %v1333 = vmul.f32 %v1331, %v1095
      %v1334 = vadd.f32 %v1294, %v1333
      %1336 = vset.pattern.permute.xlu0 0
      %1337 = vperm.xlu0 %1336, %v365
      %v1338 = vpop.permute.xlu0 %1337
      %v1340 = vadd.f32 %v1334, %v1338
      %v1341 = vmax.f32 %v1340, 0.0
      %1342 = vst [vmem:[%s340] sm:$0xf] %v1341
      %p1343 = scmp.lt.s32.totalorder %s22, 1
      %s1344 = scalar_select %p1343, %s22, 1
      %p1345 = scmp.lt.s32.totalorder %s23, 1
      %s1346 = scalar_select %p1345, %s23, 1
      %s1347 = smul.addr %s1344, 2
      %s1348 = sadd.s32 %s1346, %s1347
      %s1349 = smul.addr %s1348, 4
      %s1350 = scalar_lea.vmem %s7, %s1349
      // Predicated region
      $region57: #{dblock_com1_forward.1} parent=47 // pred_check
        %p1351 = pneg %p213
      $region58: #{dblock_com1_forward.1} parent=47 // pred_check_branch
        %1353 = sbr.rel (%p1351) target = $region60
      $region59: #{dblock_com1_forward.1} parent=47 // pred_region
        _
      $region60: #{dblock_com1_forward.1} parent=47 // pred_fallthru
        _
    $region48: #{dblock_com1_forward.1} parent=5 // pred_fallthru
      _
    %p1354 = scmp.le.s32.totalorder 2, %s13
    // Predicated region
    $region61: #{dblock_com1_forward.1} parent=5 // pred_check
      %p1355 = pneg %p1354
    $region62: #{dblock_com1_forward.1} parent=5 // pred_check_branch
      %1357 = sbr.rel (%p1355) target = $region64
    $region63: #{dblock_com1_forward.1} parent=5 // pred_region
      %s1358 = ssub.s32 %s13, 2
      // Predicated region
      $region65: #{dblock_com1_forward.1} parent=63 // pred_check
        %p1359 = pneg %p219
      $region66: #{dblock_com1_forward.1} parent=63 // pred_check_branch
        %1361 = sbr.rel (%p1359) target = $region68
      $region67: #{dblock_com1_forward.1} parent=63 // pred_region
        %p1362 = scmp.lt.s32.totalorder %s24, 1
        %s1363 = scalar_select %p1362, %s24, 1
        %p1364 = scmp.lt.s32.totalorder %s25, 1
        %s1365 = scalar_select %p1364, %s25, 1
        %s1366 = smul.addr %s1363, 2
        %s1367 = sadd.s32 %s1365, %s1366
        %s1368 = smul.addr %s1367, 4
        %s1369 = scalar_lea.vmem %s7, %s1368
      $region68: #{dblock_com1_forward.1} parent=63 // pred_fallthru
        _
    $region64: #{dblock_com1_forward.1} parent=5 // pred_fallthru
      _
  $region6: #{dblock_com1_forward.1} parent=0 // loop_footer
    %s17 = sadd.s32 1, %s13
  $region7: #{dblock_com1_forward.1} parent=0 // loop_footer_branch
    %12 = sbr.rel target = $region3
  $region8: #{dblock_com1_forward.1} parent=0 // loop_exit
    _

</llo_original>
